<compile_context>
chip_gen: v7x
topology: tpu7x:2x2x1
jax: 0.10.0
libtpu: 0.0.40
codegen_flags: <defaults>
</compile_context>

<pallas_src>
import math

import jax
import jax.numpy as jnp
from jax import lax
from jax.experimental import pallas as pl
from jax.experimental.pallas import tpu as pltpu

EPS = 1e-5  # PyTorch BatchNorm2d default eps


def _resblock_kernel(x_ref, u_ref, d_ref, bc1_ref, b1_ref, bc2_ref, b2_ref,
                     bsk_ref, bskb_ref, gamma_ref, beta_ref, s_ref, st_ref,
                     out_ref):
    NH = x_ref.shape[0]                   # N*H rows
    Cout = s_ref.shape[1]
    L = out_ref.shape[1]                  # W*Cout (lane-dense)
    inv_cnt = 1.0 / float(NH * (L // Cout))   # samples per channel = N*H*W

    up_m = u_ref[...]                     # (NH, NH): row y-1, zero at y==0
    dn_m = d_ref[...]                     # (NH, NH): row y+1, zero at y==H-1
    S = s_ref[...]                        # (W*Cout, Cout) channel gather
    St = st_ref[...]                      # (Cout, W*Cout) channel broadcast
    gamma = gamma_ref[...]                # (1, Cout)
    beta_l = beta_ref[...]                # (1, W*Cout) lane-tiled

    def shifts_cat(a):
        # (NH, La) -> (NH, 3*La): [row y-1 | row y | row y+1], zeros at edges.
        up = jnp.dot(up_m, a, preferred_element_type=jnp.float32)
        dn = jnp.dot(dn_m, a, preferred_element_type=jnp.float32)
        return jnp.concatenate([up, a, dn], axis=1)

    def batchnorm_train(y):
        # per-channel batch stats (biased variance); channel = lane % Cout
        colsum = jnp.sum(y, axis=0, keepdims=True)                        # (1, L)
        mean_c = jnp.dot(colsum, S, preferred_element_type=jnp.float32) * inv_cnt
        mean_l = jnp.dot(mean_c, St, preferred_element_type=jnp.float32)  # (1, L)
        centered = y - mean_l
        var_c = jnp.dot(jnp.sum(centered * centered, axis=0, keepdims=True), S,
                        preferred_element_type=jnp.float32) * inv_cnt     # (1, Cout)
        scale_l = jnp.dot(gamma * lax.rsqrt(var_c + EPS), St,
                          preferred_element_type=jnp.float32)             # (1, L)
        return centered * scale_l + beta_l

    x2d = x_ref[...]                                                      # (NH, W*Cin_p)

    # ---- conv1 (one matmul) -> BN -> ReLU ----
    y1 = jnp.dot(shifts_cat(x2d), bc1_ref[...],
                 preferred_element_type=jnp.float32) + b1_ref[...]
    a1 = jnp.maximum(batchnorm_train(y1), 0.0)                            # (NH, L)

    # ---- conv2 (one matmul) -> BN (same shared BatchNorm2d params) ----
    y2 = batchnorm_train(
        jnp.dot(shifts_cat(a1), bc2_ref[...],
                preferred_element_type=jnp.float32) + b2_ref[...])

    # ---- skip: 1x1 conv on the original input (block-diagonal weight) ----
    ysk = jnp.dot(x2d, bsk_ref[...],
                  preferred_element_type=jnp.float32) + bskb_ref[...]

    # ---- residual add + final ReLU; lane-dense full-width store ----
    out_ref[...] = jnp.maximum(ysk + y2, 0.0)


def _banded_conv_weight(w_oihw, W, cin_pad):
    """(Cout, Cin, 3, 3) -> (3*W*cin_pad, W*Cout).

    Row blocks are the vertical taps dy=0,1,2; within a block the horizontal
    taps are laid out block-banded so that
    out2d[r, xo*Cout+co] = sum_dy (Xshift_dy @ B_dy)[r, xo*Cout+co]."""
    co, ci = w_oihw.shape[0], w_oihw.shape[1]
    w = jnp.pad(w_oihw.astype(jnp.float32),
                ((0, 0), (0, cin_pad - ci), (0, 0), (0, 0)))
    xi = jnp.arange(W)[:, None]
    xo = jnp.arange(W)[None, :]
    dx = xi - xo + 1                                      # kw index
    valid = ((dx >= 0) & (dx <= 2)).astype(jnp.float32)   # (W, W)
    dxc = jnp.clip(dx, 0, 2)
    blocks = []
    for dy in range(3):
        wd = jnp.transpose(w[:, :, dy, :], (2, 1, 0))     # (3, cin_pad, Cout) [kw,ci,co]
        wsel = wd[dxc] * valid[:, :, None, None]          # (W, W, cin_pad, Cout)
        b = jnp.transpose(wsel, (0, 2, 1, 3)).reshape(W * cin_pad, W * co)
        blocks.append(b)
    return jnp.concatenate(blocks, axis=0)


def resblock_pallas(x_nchw, params):
    N, Cin, H, W = x_nchw.shape
    Cout = params["b1"].shape[0]

    # Pad Cin so the input slab's lane width W*Cin_p is a multiple of 128.
    if (W * Cin) % 128 != 0 and 128 % W == 0:
        g = 128 // W
        Cin_p = -(-Cin // g) * g
    else:
        Cin_p = Cin

    x = jnp.transpose(x_nchw, (0, 2, 3, 1)).astype(jnp.float32)       # NHWC
    if Cin_p != Cin:
        x = jnp.pad(x, ((0, 0), (0, 0), (0, 0), (0, Cin_p - Cin)))
    x2d = x.reshape(N * H, W * Cin_p)                                 # lane-dense slab

    # Vertical-tap row-shift matrices (zeros at image boundaries).
    r = jnp.arange(N * H)
    U = ((r[:, None] - 1 == r[None, :]) &
         ((r[:, None] % H) != 0)).astype(jnp.float32)                 # row y-1
    D = ((r[:, None] + 1 == r[None, :]) &
         ((r[:, None] % H) != (H - 1))).astype(jnp.float32)           # row y+1

    # Block-banded conv weights: one matmul per conv.
    Bc1 = _banded_conv_weight(params["w1"], W, Cin_p)                 # (3*W*Cin_p, W*Cout)
    Bc2 = _banded_conv_weight(params["w2"], W, Cout)                  # (3*W*Cout,  W*Cout)
    wsk_t = jnp.pad(params["wsk"][:, :, 0, 0].astype(jnp.float32).T,
                    ((0, Cin_p - Cin), (0, 0)))                       # (Cin_p, Cout)
    Bsk = jnp.einsum("ab,ij->aibj", jnp.eye(W, dtype=jnp.float32),
                     wsk_t).reshape(W * Cin_p, W * Cout)              # block-diagonal 1x1

    # Lane-tiled per-channel vectors and channel gather/broadcast matrices.
    tile_l = lambda v: jnp.tile(v.astype(jnp.float32), W).reshape(1, W * Cout)
    b1_l, b2_l = tile_l(params["b1"]), tile_l(params["b2"])
    bsk_l, beta_l = tile_l(params["bsk"]), tile_l(params["beta"])
    gamma = params["gamma"].astype(jnp.float32).reshape(1, Cout)
    S = jnp.tile(jnp.eye(Cout, dtype=jnp.float32), (W, 1))            # (W*Cout, Cout)
    St = S.T

    vmem = pl.BlockSpec(memory_space=pltpu.MemorySpace.VMEM)
    out2d = pl.pallas_call(
        _resblock_kernel,
        out_shape=jax.ShapeDtypeStruct((N * H, W * Cout), jnp.float32),
        in_specs=[vmem] * 13,
        out_specs=vmem,
        compiler_params=pltpu.CompilerParams(vmem_limit_bytes=32 * 1024 * 1024),
    )(x2d, U, D, Bc1, b1_l, Bc2, b2_l, Bsk, bsk_l, gamma, beta_l, S, St)

    # (N*H, W*Cout) -> NHWC is a free reshape; transpose back to NCHW.
    return jnp.transpose(out2d.reshape(N, H, W, Cout), (0, 3, 1, 2))


def resblock_ref(x_nchw, p):
    # pure-JAX reference of the same math (for self-check)
    x = jnp.transpose(x_nchw, (0, 2, 3, 1)).astype(jnp.float32)

    def conv(xx, w_oihw, b):
        w = jnp.transpose(w_oihw, (2, 3, 1, 0))  # HWIO
        y = lax.conv_general_dilated(xx, w, (1, 1), "SAME",
                                     dimension_numbers=("NHWC", "HWIO", "NHWC"))
        return y + b.reshape(1, 1, 1, -1)

    def bn(y):
        mean = y.mean(axis=(0, 1, 2), keepdims=True)
        var = jnp.square(y - mean).mean(axis=(0, 1, 2), keepdims=True)
        return ((y - mean) / jnp.sqrt(var + EPS)
                * p["gamma"].reshape(1, 1, 1, -1) + p["beta"].reshape(1, 1, 1, -1))

    y = jax.nn.relu(bn(conv(x, p["w1"], p["b1"])))
    y = bn(conv(y, p["w2"], p["b2"]))
    s = conv(x, p["wsk"], p["bsk"])
    return jnp.transpose(jax.nn.relu(s + y), (0, 3, 1, 2))


if __name__ == "__main__":
    key = jax.random.PRNGKey(0)
    N, Cin, Cout, H, W = 2, 4, 8, 16, 16
    ks = jax.random.split(key, 7)

    def u(k, shape, fan_in):
        b = 1.0 / math.sqrt(fan_in)
        return jax.random.uniform(k, shape, jnp.float32, -b, b)

    params = {
        # nn.Conv2d weight layout: (Cout, Cin, kH, kW)
        "w1": u(ks[0], (Cout, Cin, 3, 3), Cin * 9),
        "b1": u(ks[1], (Cout,), Cin * 9),
        "w2": u(ks[2], (Cout, Cout, 3, 3), Cout * 9),
        "b2": u(ks[3], (Cout,), Cout * 9),
        # BatchNorm2d defaults: weight=1, bias=0 (single instance shared twice)
        "gamma": jnp.ones((Cout,), jnp.float32),
        "beta": jnp.zeros((Cout,), jnp.float32),
        # skip 1x1 conv (channels_in != channels_out)
        "wsk": u(ks[4], (Cout, Cin, 1, 1), Cin),
        "bsk": u(ks[5], (Cout,), Cin),
    }
    # TODO(synk): BatchNorm running_mean/running_var buffer updates are a
    # training-mode side effect and do not affect this forward's output.

    x = jax.random.normal(ks[6], (N, Cin, H, W), jnp.float32)

    out = jax.block_until_ready(jax.jit(resblock_pallas)(x, params))
    ref = jax.block_until_ready(resblock_ref(x, params))

    assert out.shape == (N, Cout, H, W)
    err = float(jnp.max(jnp.abs(out - ref)))
    assert err < 2e-3, f"max abs err {err}"
    print("KERNEL_OK")
</pallas_src>

<mosaic_0001>
module attributes {stable_mosaic.version = 11 : i64} {
  func.func @_resblock_kernel(%arg0: memref<32x128xf32, #tpu.memory_space<vmem>>, %arg1: memref<32x32xf32, #tpu.memory_space<vmem>>, %arg2: memref<32x32xf32, #tpu.memory_space<vmem>>, %arg3: memref<384x128xf32, #tpu.memory_space<vmem>>, %arg4: memref<1x128xf32, #tpu.memory_space<vmem>>, %arg5: memref<384x128xf32, #tpu.memory_space<vmem>>, %arg6: memref<1x128xf32, #tpu.memory_space<vmem>>, %arg7: memref<128x128xf32, #tpu.memory_space<vmem>>, %arg8: memref<1x128xf32, #tpu.memory_space<vmem>>, %arg9: memref<1x8xf32, #tpu.memory_space<vmem>>, %arg10: memref<1x128xf32, #tpu.memory_space<vmem>>, %arg11: memref<128x8xf32, #tpu.memory_space<vmem>>, %arg12: memref<8x128xf32, #tpu.memory_space<vmem>>, %arg13: memref<32x128xf32, #tpu.memory_space<vmem>>) attributes {dimension_semantics = [], scalar_prefetch = 0 : i64, scratch_operands = 0 : i64, tpu.core_type = #tpu.core_type<tc>} {
    %c0 = arith.constant 0 : index
    %c0_0 = arith.constant 0 : index
    %0 = vector.load %arg1[%c0, %c0_0] : memref<32x32xf32, #tpu.memory_space<vmem>>, vector<32x32xf32>
    %c0_1 = arith.constant 0 : index
    %c0_2 = arith.constant 0 : index
    %1 = vector.load %arg2[%c0_1, %c0_2] : memref<32x32xf32, #tpu.memory_space<vmem>>, vector<32x32xf32>
    %c0_3 = arith.constant 0 : index
    %c0_4 = arith.constant 0 : index
    %2 = vector.load %arg11[%c0_3, %c0_4] : memref<128x8xf32, #tpu.memory_space<vmem>>, vector<128x8xf32>
    %c0_5 = arith.constant 0 : index
    %c0_6 = arith.constant 0 : index
    %3 = vector.load %arg12[%c0_5, %c0_6] : memref<8x128xf32, #tpu.memory_space<vmem>>, vector<8x128xf32>
    %c0_7 = arith.constant 0 : index
    %c0_8 = arith.constant 0 : index
    %4 = vector.load %arg9[%c0_7, %c0_8] : memref<1x8xf32, #tpu.memory_space<vmem>>, vector<1x8xf32>
    %c0_9 = arith.constant 0 : index
    %c0_10 = arith.constant 0 : index
    %5 = vector.load %arg10[%c0_9, %c0_10] : memref<1x128xf32, #tpu.memory_space<vmem>>, vector<1x128xf32>
    %c0_11 = arith.constant 0 : index
    %c0_12 = arith.constant 0 : index
    %6 = vector.load %arg0[%c0_11, %c0_12] : memref<32x128xf32, #tpu.memory_space<vmem>>, vector<32x128xf32>
    %cst = arith.constant dense<0.000000e+00> : vector<32x128xf32>
    %7 = tpu.matmul %0, %6, %cst {dimension_numbers = #tpu.dot_dimension_numbers<[1], [0], [0], [1], [0, 0, 1, 1], [], []>} : vector<32x32xf32>, vector<32x128xf32>, vector<32x128xf32> -> vector<32x128xf32>
    %cst_13 = arith.constant dense<0.000000e+00> : vector<32x128xf32>
    %8 = tpu.matmul %1, %6, %cst_13 {dimension_numbers = #tpu.dot_dimension_numbers<[1], [0], [0], [1], [0, 0, 1, 1], [], []>} : vector<32x32xf32>, vector<32x128xf32>, vector<32x128xf32> -> vector<32x128xf32>
    %9 = tpu.concatenate %7, %6, %8 in 1 : vector<32x128xf32>, vector<32x128xf32>, vector<32x128xf32> -> vector<32x384xf32>
    %c0_14 = arith.constant 0 : index
    %c0_15 = arith.constant 0 : index
    %10 = vector.load %arg3[%c0_14, %c0_15] : memref<384x128xf32, #tpu.memory_space<vmem>>, vector<384x128xf32>
    %cst_16 = arith.constant dense<0.000000e+00> : vector<32x128xf32>
    %11 = tpu.matmul %9, %10, %cst_16 {dimension_numbers = #tpu.dot_dimension_numbers<[1], [0], [0], [1], [0, 0, 1, 1], [], []>} : vector<32x384xf32>, vector<384x128xf32>, vector<32x128xf32> -> vector<32x128xf32>
    %c0_17 = arith.constant 0 : index
    %c0_18 = arith.constant 0 : index
    %12 = vector.load %arg4[%c0_17, %c0_18] : memref<1x128xf32, #tpu.memory_space<vmem>>, vector<1x128xf32>
    %13 = vector.broadcast %12 : vector<1x128xf32> to vector<32x128xf32>
    %14 = arith.addf %11, %13 : vector<32x128xf32>
    %cst_19 = arith.constant dense<0.000000e+00> : vector<128xf32>
    %15 = vector.multi_reduction <add>, %14, %cst_19 [0] : vector<32x128xf32> to vector<128xf32>
    %16 = vector.shape_cast %15 : vector<128xf32> to vector<1x128xf32>
    %cst_20 = arith.constant dense<0.000000e+00> : vector<1x8xf32>
    %17 = tpu.matmul %16, %2, %cst_20 {dimension_numbers = #tpu.dot_dimension_numbers<[1], [0], [0], [1], [0, 0, 1, 1], [], []>} : vector<1x128xf32>, vector<128x8xf32>, vector<1x8xf32> -> vector<1x8xf32>
    %cst_21 = arith.constant 0.001953125 : f32
    %18 = vector.broadcast %cst_21 : f32 to vector<1x8xf32>
    %19 = arith.mulf %17, %18 : vector<1x8xf32>
    %cst_22 = arith.constant dense<0.000000e+00> : vector<1x128xf32>
    %20 = tpu.matmul %19, %3, %cst_22 {dimension_numbers = #tpu.dot_dimension_numbers<[1], [0], [0], [1], [0, 0, 1, 1], [], []>} : vector<1x8xf32>, vector<8x128xf32>, vector<1x128xf32> -> vector<1x128xf32>
    %21 = vector.broadcast %20 : vector<1x128xf32> to vector<32x128xf32>
    %22 = arith.subf %14, %21 : vector<32x128xf32>
    %23 = arith.mulf %22, %22 : vector<32x128xf32>
    %cst_23 = arith.constant dense<0.000000e+00> : vector<128xf32>
    %24 = vector.multi_reduction <add>, %23, %cst_23 [0] : vector<32x128xf32> to vector<128xf32>
    %25 = vector.shape_cast %24 : vector<128xf32> to vector<1x128xf32>
    %cst_24 = arith.constant dense<0.000000e+00> : vector<1x8xf32>
    %26 = tpu.matmul %25, %2, %cst_24 {dimension_numbers = #tpu.dot_dimension_numbers<[1], [0], [0], [1], [0, 0, 1, 1], [], []>} : vector<1x128xf32>, vector<128x8xf32>, vector<1x8xf32> -> vector<1x8xf32>
    %cst_25 = arith.constant 0.001953125 : f32
    %27 = vector.broadcast %cst_25 : f32 to vector<1x8xf32>
    %28 = arith.mulf %26, %27 : vector<1x8xf32>
    %cst_26 = arith.constant 9.99999974E-6 : f32
    %29 = vector.broadcast %cst_26 : f32 to vector<1x8xf32>
    %30 = arith.addf %28, %29 : vector<1x8xf32>
    %31 = math.rsqrt %30 : vector<1x8xf32>
    %32 = arith.mulf %4, %31 : vector<1x8xf32>
    %cst_27 = arith.constant dense<0.000000e+00> : vector<1x128xf32>
    %33 = tpu.matmul %32, %3, %cst_27 {dimension_numbers = #tpu.dot_dimension_numbers<[1], [0], [0], [1], [0, 0, 1, 1], [], []>} : vector<1x8xf32>, vector<8x128xf32>, vector<1x128xf32> -> vector<1x128xf32>
    %34 = vector.broadcast %33 : vector<1x128xf32> to vector<32x128xf32>
    %35 = arith.mulf %22, %34 : vector<32x128xf32>
    %36 = vector.broadcast %5 : vector<1x128xf32> to vector<32x128xf32>
    %37 = arith.addf %35, %36 : vector<32x128xf32>
    %cst_28 = arith.constant 0.000000e+00 : f32
    %38 = vector.broadcast %cst_28 : f32 to vector<32x128xf32>
    %39 = arith.maximumf %37, %38 : vector<32x128xf32>
    %cst_29 = arith.constant dense<0.000000e+00> : vector<32x128xf32>
    %40 = tpu.matmul %0, %39, %cst_29 {dimension_numbers = #tpu.dot_dimension_numbers<[1], [0], [0], [1], [0, 0, 1, 1], [], []>} : vector<32x32xf32>, vector<32x128xf32>, vector<32x128xf32> -> vector<32x128xf32>
    %cst_30 = arith.constant dense<0.000000e+00> : vector<32x128xf32>
    %41 = tpu.matmul %1, %39, %cst_30 {dimension_numbers = #tpu.dot_dimension_numbers<[1], [0], [0], [1], [0, 0, 1, 1], [], []>} : vector<32x32xf32>, vector<32x128xf32>, vector<32x128xf32> -> vector<32x128xf32>
    %42 = tpu.concatenate %40, %39, %41 in 1 : vector<32x128xf32>, vector<32x128xf32>, vector<32x128xf32> -> vector<32x384xf32>
    %c0_31 = arith.constant 0 : index
    %c0_32 = arith.constant 0 : index
    %43 = vector.load %arg5[%c0_31, %c0_32] : memref<384x128xf32, #tpu.memory_space<vmem>>, vector<384x128xf32>
    %cst_33 = arith.constant dense<0.000000e+00> : vector<32x128xf32>
    %44 = tpu.matmul %42, %43, %cst_33 {dimension_numbers = #tpu.dot_dimension_numbers<[1], [0], [0], [1], [0, 0, 1, 1], [], []>} : vector<32x384xf32>, vector<384x128xf32>, vector<32x128xf32> -> vector<32x128xf32>
    %c0_34 = arith.constant 0 : index
    %c0_35 = arith.constant 0 : index
    %45 = vector.load %arg6[%c0_34, %c0_35] : memref<1x128xf32, #tpu.memory_space<vmem>>, vector<1x128xf32>
    %46 = vector.broadcast %45 : vector<1x128xf32> to vector<32x128xf32>
    %47 = arith.addf %44, %46 : vector<32x128xf32>
    %cst_36 = arith.constant dense<0.000000e+00> : vector<128xf32>
    %48 = vector.multi_reduction <add>, %47, %cst_36 [0] : vector<32x128xf32> to vector<128xf32>
    %49 = vector.shape_cast %48 : vector<128xf32> to vector<1x128xf32>
    %cst_37 = arith.constant dense<0.000000e+00> : vector<1x8xf32>
    %50 = tpu.matmul %49, %2, %cst_37 {dimension_numbers = #tpu.dot_dimension_numbers<[1], [0], [0], [1], [0, 0, 1, 1], [], []>} : vector<1x128xf32>, vector<128x8xf32>, vector<1x8xf32> -> vector<1x8xf32>
    %cst_38 = arith.constant 0.001953125 : f32
    %51 = vector.broadcast %cst_38 : f32 to vector<1x8xf32>
    %52 = arith.mulf %50, %51 : vector<1x8xf32>
    %cst_39 = arith.constant dense<0.000000e+00> : vector<1x128xf32>
    %53 = tpu.matmul %52, %3, %cst_39 {dimension_numbers = #tpu.dot_dimension_numbers<[1], [0], [0], [1], [0, 0, 1, 1], [], []>} : vector<1x8xf32>, vector<8x128xf32>, vector<1x128xf32> -> vector<1x128xf32>
    %54 = vector.broadcast %53 : vector<1x128xf32> to vector<32x128xf32>
    %55 = arith.subf %47, %54 : vector<32x128xf32>
    %56 = arith.mulf %55, %55 : vector<32x128xf32>
    %cst_40 = arith.constant dense<0.000000e+00> : vector<128xf32>
    %57 = vector.multi_reduction <add>, %56, %cst_40 [0] : vector<32x128xf32> to vector<128xf32>
    %58 = vector.shape_cast %57 : vector<128xf32> to vector<1x128xf32>
    %cst_41 = arith.constant dense<0.000000e+00> : vector<1x8xf32>
    %59 = tpu.matmul %58, %2, %cst_41 {dimension_numbers = #tpu.dot_dimension_numbers<[1], [0], [0], [1], [0, 0, 1, 1], [], []>} : vector<1x128xf32>, vector<128x8xf32>, vector<1x8xf32> -> vector<1x8xf32>
    %cst_42 = arith.constant 0.001953125 : f32
    %60 = vector.broadcast %cst_42 : f32 to vector<1x8xf32>
    %61 = arith.mulf %59, %60 : vector<1x8xf32>
    %cst_43 = arith.constant 9.99999974E-6 : f32
    %62 = vector.broadcast %cst_43 : f32 to vector<1x8xf32>
    %63 = arith.addf %61, %62 : vector<1x8xf32>
    %64 = math.rsqrt %63 : vector<1x8xf32>
    %65 = arith.mulf %4, %64 : vector<1x8xf32>
    %cst_44 = arith.constant dense<0.000000e+00> : vector<1x128xf32>
    %66 = tpu.matmul %65, %3, %cst_44 {dimension_numbers = #tpu.dot_dimension_numbers<[1], [0], [0], [1], [0, 0, 1, 1], [], []>} : vector<1x8xf32>, vector<8x128xf32>, vector<1x128xf32> -> vector<1x128xf32>
    %67 = vector.broadcast %66 : vector<1x128xf32> to vector<32x128xf32>
    %68 = arith.mulf %55, %67 : vector<32x128xf32>
    %69 = vector.broadcast %5 : vector<1x128xf32> to vector<32x128xf32>
    %70 = arith.addf %68, %69 : vector<32x128xf32>
    %c0_45 = arith.constant 0 : index
    %c0_46 = arith.constant 0 : index
    %71 = vector.load %arg7[%c0_45, %c0_46] : memref<128x128xf32, #tpu.memory_space<vmem>>, vector<128x128xf32>
    %cst_47 = arith.constant dense<0.000000e+00> : vector<32x128xf32>
    %72 = tpu.matmul %6, %71, %cst_47 {dimension_numbers = #tpu.dot_dimension_numbers<[1], [0], [0], [1], [0, 0, 1, 1], [], []>} : vector<32x128xf32>, vector<128x128xf32>, vector<32x128xf32> -> vector<32x128xf32>
    %c0_48 = arith.constant 0 : index
    %c0_49 = arith.constant 0 : index
    %73 = vector.load %arg8[%c0_48, %c0_49] : memref<1x128xf32, #tpu.memory_space<vmem>>, vector<1x128xf32>
    %74 = vector.broadcast %73 : vector<1x128xf32> to vector<32x128xf32>
    %75 = arith.addf %72, %74 : vector<32x128xf32>
    %76 = arith.addf %75, %70 : vector<32x128xf32>
    %cst_50 = arith.constant 0.000000e+00 : f32
    %77 = vector.broadcast %cst_50 : f32 to vector<32x128xf32>
    %78 = arith.maximumf %76, %77 : vector<32x128xf32>
    %c0_51 = arith.constant 0 : index
    %c0_52 = arith.constant 0 : index
    %79 = vector.load %arg13[%c0_51, %c0_52] : memref<32x128xf32, #tpu.memory_space<vmem>>, vector<32x128xf32>
    tpu.vector_store %arg13[%c0_51, %c0_52], %78 {strides = array<i32>} : memref<32x128xf32, #tpu.memory_space<vmem>>, vector<32x128xf32>,
    return
  }
}

</mosaic_0001>

<llo_original>
// kernel: tile.49
$region0: #{tile.49}
  %s0 = inlined_call_operand.vmem [shape: f32[16,8,8], index: 0, kind: input, shape index: {}]
  %s1 = inlined_call_operand.vmem [shape: f32[128,8], index: 1, kind: output, shape index: {}]
  %s2 = smov 3
  %v3 = vld [vmem:[%s0] ss:$16 sm:%s2]
  %s4 = smov 12
  %v5 = vld [vmem:[%s0] ss:$16 sm:%s4]
  %vm6 = vcmask 1043458
  %v7 = vsel %vm6, %v5, %v3
  %s8 = smov 48
  %v9 = vld [vmem:[%s0] ss:$16 sm:%s8]
  %vm10 = vcmask 1045508
  %v11 = vsel %vm10, %v9, %v7
  %s12 = smov 192
  %v13 = vld [vmem:[%s0] ss:$16 sm:%s12]
  %vm14 = vcmask 1047558
  %v15 = vsel %vm14, %v13, %v11
  %vm16 = vcmask 64512
  %17 = vst.msk [vmem:[%s1] sm:$0xff] %vm16, %v15
  %s18 = scalar_lea.vmem %s0, 15
  %s19 = smov 3
  %v20 = vld [vmem:[%s18] ss:$16 sm:%s19]
  %s21 = scalar_lea.vmem %s0, 15
  %s22 = smov 12
  %v23 = vld [vmem:[%s21] ss:$16 sm:%s22]
  %vm24 = vcmask 1043458
  %v25 = vsel %vm24, %v23, %v20
  %s26 = scalar_lea.vmem %s0, 15
  %s27 = smov 48
  %v28 = vld [vmem:[%s26] ss:$16 sm:%s27]
  %vm29 = vcmask 1045508
  %v30 = vsel %vm29, %v28, %v25
  %s31 = scalar_lea.vmem %s0, 15
  %s32 = smov 192
  %v33 = vld [vmem:[%s31] ss:$16 sm:%s32]
  %vm34 = vcmask 1047558
  %v35 = vsel %vm34, %v33, %v30
  %36 = vrot.lane.b32.xlu0 %v35, 120
  %v37 = vpop.permute.xlu0 %36
  %vm38 = vcmask 1048512
  %39 = vst.msk [vmem:[%s1] sm:$0xff] %vm38, %v37
  %s40 = scalar_lea.vmem %s0, 14
  %s41 = smov 3
  %v42 = vld [vmem:[%s40] ss:$16 sm:%s41]
  %s43 = scalar_lea.vmem %s0, 14
  %s44 = smov 12
  %v45 = vld [vmem:[%s43] ss:$16 sm:%s44]
  %vm46 = vcmask 1043458
  %v47 = vsel %vm46, %v45, %v42
  %s48 = scalar_lea.vmem %s0, 14
  %s49 = smov 48
  %v50 = vld [vmem:[%s48] ss:$16 sm:%s49]
  %vm51 = vcmask 1045508
  %v52 = vsel %vm51, %v50, %v47
  %s53 = scalar_lea.vmem %s0, 14
  %s54 = smov 192
  %v55 = vld [vmem:[%s53] ss:$16 sm:%s54]
  %vm56 = vcmask 1047558
  %v57 = vsel %vm56, %v55, %v52
  %58 = vrot.lane.b32.xlu0 %v57, 112
  %v59 = vpop.permute.xlu0 %58
  %vm60 = vcmask 982912
  %61 = vst.msk [vmem:[%s1] sm:$0xff] %vm60, %v59
  %s62 = scalar_lea.vmem %s0, 13
  %s63 = smov 3
  %v64 = vld [vmem:[%s62] ss:$16 sm:%s63]
  %s65 = scalar_lea.vmem %s0, 13
  %s66 = smov 12
  %v67 = vld [vmem:[%s65] ss:$16 sm:%s66]
  %vm68 = vcmask 1043458
  %v69 = vsel %vm68, %v67, %v64
  %s70 = scalar_lea.vmem %s0, 13
  %s71 = smov 48
  %v72 = vld [vmem:[%s70] ss:$16 sm:%s71]
  %vm73 = vcmask 1045508
  %v74 = vsel %vm73, %v72, %v69
  %s75 = scalar_lea.vmem %s0, 13
  %s76 = smov 192
  %v77 = vld [vmem:[%s75] ss:$16 sm:%s76]
  %vm78 = vcmask 1047558
  %v79 = vsel %vm78, %v77, %v74
  %80 = vrot.lane.b32.xlu0 %v79, 104
  %v81 = vpop.permute.xlu0 %80
  %vm82 = vcmask 917312
  %83 = vst.msk [vmem:[%s1] sm:$0xff] %vm82, %v81
  %s84 = scalar_lea.vmem %s0, 12
  %s85 = smov 3
  %v86 = vld [vmem:[%s84] ss:$16 sm:%s85]
  %s87 = scalar_lea.vmem %s0, 12
  %s88 = smov 12
  %v89 = vld [vmem:[%s87] ss:$16 sm:%s88]
  %vm90 = vcmask 1043458
  %v91 = vsel %vm90, %v89, %v86
  %s92 = scalar_lea.vmem %s0, 12
  %s93 = smov 48
  %v94 = vld [vmem:[%s92] ss:$16 sm:%s93]
  %vm95 = vcmask 1045508
  %v96 = vsel %vm95, %v94, %v91
  %s97 = scalar_lea.vmem %s0, 12
  %s98 = smov 192
  %v99 = vld [vmem:[%s97] ss:$16 sm:%s98]
  %vm100 = vcmask 1047558
  %v101 = vsel %vm100, %v99, %v96
  %102 = vrot.lane.b32.xlu0 %v101, 96
  %v103 = vpop.permute.xlu0 %102
  %vm104 = vcmask 851712
  %105 = vst.msk [vmem:[%s1] sm:$0xff] %vm104, %v103
  %s106 = scalar_lea.vmem %s0, 11
  %s107 = smov 3
  %v108 = vld [vmem:[%s106] ss:$16 sm:%s107]
  %s109 = scalar_lea.vmem %s0, 11
  %s110 = smov 12
  %v111 = vld [vmem:[%s109] ss:$16 sm:%s110]
  %vm112 = vcmask 1043458
  %v113 = vsel %vm112, %v111, %v108
  %s114 = scalar_lea.vmem %s0, 11
  %s115 = smov 48
  %v116 = vld [vmem:[%s114] ss:$16 sm:%s115]
  %vm117 = vcmask 1045508
  %v118 = vsel %vm117, %v116, %v113
  %s119 = scalar_lea.vmem %s0, 11
  %s120 = smov 192
  %v121 = vld [vmem:[%s119] ss:$16 sm:%s120]
  %vm122 = vcmask 1047558
  %v123 = vsel %vm122, %v121, %v118
  %124 = vrot.lane.b32.xlu0 %v123, 88
  %v125 = vpop.permute.xlu0 %124
  %vm126 = vcmask 786112
  %127 = vst.msk [vmem:[%s1] sm:$0xff] %vm126, %v125
  %s128 = scalar_lea.vmem %s0, 10
  %s129 = smov 3
  %v130 = vld [vmem:[%s128] ss:$16 sm:%s129]
  %s131 = scalar_lea.vmem %s0, 10
  %s132 = smov 12
  %v133 = vld [vmem:[%s131] ss:$16 sm:%s132]
  %vm134 = vcmask 1043458
  %v135 = vsel %vm134, %v133, %v130
  %s136 = scalar_lea.vmem %s0, 10
  %s137 = smov 48
  %v138 = vld [vmem:[%s136] ss:$16 sm:%s137]
  %vm139 = vcmask 1045508
  %v140 = vsel %vm139, %v138, %v135
  %s141 = scalar_lea.vmem %s0, 10
  %s142 = smov 192
  %v143 = vld [vmem:[%s141] ss:$16 sm:%s142]
  %vm144 = vcmask 1047558
  %v145 = vsel %vm144, %v143, %v140
  %146 = vrot.lane.b32.xlu0 %v145, 80
  %v147 = vpop.permute.xlu0 %146
  %vm148 = vcmask 720512
  %149 = vst.msk [vmem:[%s1] sm:$0xff] %vm148, %v147
  %s150 = scalar_lea.vmem %s0, 9
  %s151 = smov 3
  %v152 = vld [vmem:[%s150] ss:$16 sm:%s151]
  %s153 = scalar_lea.vmem %s0, 9
  %s154 = smov 12
  %v155 = vld [vmem:[%s153] ss:$16 sm:%s154]
  %vm156 = vcmask 1043458
  %v157 = vsel %vm156, %v155, %v152
  %s158 = scalar_lea.vmem %s0, 9
  %s159 = smov 48
  %v160 = vld [vmem:[%s158] ss:$16 sm:%s159]
  %vm161 = vcmask 1045508
  %v162 = vsel %vm161, %v160, %v157
  %s163 = scalar_lea.vmem %s0, 9
  %s164 = smov 192
  %v165 = vld [vmem:[%s163] ss:$16 sm:%s164]
  %vm166 = vcmask 1047558
  %v167 = vsel %vm166, %v165, %v162
  %168 = vrot.lane.b32.xlu0 %v167, 72
  %v169 = vpop.permute.xlu0 %168
  %vm170 = vcmask 654912
  %171 = vst.msk [vmem:[%s1] sm:$0xff] %vm170, %v169
  %s172 = scalar_lea.vmem %s0, 8
  %s173 = smov 3
  %v174 = vld [vmem:[%s172] ss:$16 sm:%s173]
  %s175 = scalar_lea.vmem %s0, 8
  %s176 = smov 12
  %v177 = vld [vmem:[%s175] ss:$16 sm:%s176]
  %vm178 = vcmask 1043458
  %v179 = vsel %vm178, %v177, %v174
  %s180 = scalar_lea.vmem %s0, 8
  %s181 = smov 48
  %v182 = vld [vmem:[%s180] ss:$16 sm:%s181]
  %vm183 = vcmask 1045508
  %v184 = vsel %vm183, %v182, %v179
  %s185 = scalar_lea.vmem %s0, 8
  %s186 = smov 192
  %v187 = vld [vmem:[%s185] ss:$16 sm:%s186]
  %vm188 = vcmask 1047558
  %v189 = vsel %vm188, %v187, %v184
  %190 = vrot.lane.b32.xlu0 %v189, 64
  %v191 = vpop.permute.xlu0 %190
  %vm192 = vcmask 589312
  %193 = vst.msk [vmem:[%s1] sm:$0xff] %vm192, %v191
  %s194 = scalar_lea.vmem %s0, 7
  %s195 = smov 3
  %v196 = vld [vmem:[%s194] ss:$16 sm:%s195]
  %s197 = scalar_lea.vmem %s0, 7
  %s198 = smov 12
  %v199 = vld [vmem:[%s197] ss:$16 sm:%s198]
  %vm200 = vcmask 1043458
  %v201 = vsel %vm200, %v199, %v196
  %s202 = scalar_lea.vmem %s0, 7
  %s203 = smov 48
  %v204 = vld [vmem:[%s202] ss:$16 sm:%s203]
  %vm205 = vcmask 1045508
  %v206 = vsel %vm205, %v204, %v201
  %s207 = scalar_lea.vmem %s0, 7
  %s208 = smov 192
  %v209 = vld [vmem:[%s207] ss:$16 sm:%s208]
  %vm210 = vcmask 1047558
  %v211 = vsel %vm210, %v209, %v206
  %212 = vrot.lane.b32.xlu0 %v211, 56
  %v213 = vpop.permute.xlu0 %212
  %vm214 = vcmask 523712
  %215 = vst.msk [vmem:[%s1] sm:$0xff] %vm214, %v213
  %s216 = scalar_lea.vmem %s0, 6
  %s217 = smov 3
  %v218 = vld [vmem:[%s216] ss:$16 sm:%s217]
  %s219 = scalar_lea.vmem %s0, 6
  %s220 = smov 12
  %v221 = vld [vmem:[%s219] ss:$16 sm:%s220]
  %vm222 = vcmask 1043458
  %v223 = vsel %vm222, %v221, %v218
  %s224 = scalar_lea.vmem %s0, 6
  %s225 = smov 48
  %v226 = vld [vmem:[%s224] ss:$16 sm:%s225]
  %vm227 = vcmask 1045508
  %v228 = vsel %vm227, %v226, %v223
  %s229 = scalar_lea.vmem %s0, 6
  %s230 = smov 192
  %v231 = vld [vmem:[%s229] ss:$16 sm:%s230]
  %vm232 = vcmask 1047558
  %v233 = vsel %vm232, %v231, %v228
  %234 = vrot.lane.b32.xlu0 %v233, 48
  %v235 = vpop.permute.xlu0 %234
  %vm236 = vcmask 458112
  %237 = vst.msk [vmem:[%s1] sm:$0xff] %vm236, %v235
  %s238 = scalar_lea.vmem %s0, 5
  %s239 = smov 3
  %v240 = vld [vmem:[%s238] ss:$16 sm:%s239]
  %s241 = scalar_lea.vmem %s0, 5
  %s242 = smov 12
  %v243 = vld [vmem:[%s241] ss:$16 sm:%s242]
  %vm244 = vcmask 1043458
  %v245 = vsel %vm244, %v243, %v240
  %s246 = scalar_lea.vmem %s0, 5
  %s247 = smov 48
  %v248 = vld [vmem:[%s246] ss:$16 sm:%s247]
  %vm249 = vcmask 1045508
  %v250 = vsel %vm249, %v248, %v245
  %s251 = scalar_lea.vmem %s0, 5
  %s252 = smov 192
  %v253 = vld [vmem:[%s251] ss:$16 sm:%s252]
  %vm254 = vcmask 1047558
  %v255 = vsel %vm254, %v253, %v250
  %256 = vrot.lane.b32.xlu0 %v255, 40
  %v257 = vpop.permute.xlu0 %256
  %vm258 = vcmask 392512
  %259 = vst.msk [vmem:[%s1] sm:$0xff] %vm258, %v257
  %s260 = scalar_lea.vmem %s0, 4
  %s261 = smov 3
  %v262 = vld [vmem:[%s260] ss:$16 sm:%s261]
  %s263 = scalar_lea.vmem %s0, 4
  %s264 = smov 12
  %v265 = vld [vmem:[%s263] ss:$16 sm:%s264]
  %vm266 = vcmask 1043458
  %v267 = vsel %vm266, %v265, %v262
  %s268 = scalar_lea.vmem %s0, 4
  %s269 = smov 48
  %v270 = vld [vmem:[%s268] ss:$16 sm:%s269]
  %vm271 = vcmask 1045508
  %v272 = vsel %vm271, %v270, %v267
  %s273 = scalar_lea.vmem %s0, 4
  %s274 = smov 192
  %v275 = vld [vmem:[%s273] ss:$16 sm:%s274]
  %vm276 = vcmask 1047558
  %v277 = vsel %vm276, %v275, %v272
  %278 = vrot.lane.b32.xlu0 %v277, 32
  %v279 = vpop.permute.xlu0 %278
  %vm280 = vcmask 326912
  %281 = vst.msk [vmem:[%s1] sm:$0xff] %vm280, %v279
  %s282 = scalar_lea.vmem %s0, 3
  %s283 = smov 3
  %v284 = vld [vmem:[%s282] ss:$16 sm:%s283]
  %s285 = scalar_lea.vmem %s0, 3
  %s286 = smov 12
  %v287 = vld [vmem:[%s285] ss:$16 sm:%s286]
  %vm288 = vcmask 1043458
  %v289 = vsel %vm288, %v287, %v284
  %s290 = scalar_lea.vmem %s0, 3
  %s291 = smov 48
  %v292 = vld [vmem:[%s290] ss:$16 sm:%s291]
  %vm293 = vcmask 1045508
  %v294 = vsel %vm293, %v292, %v289
  %s295 = scalar_lea.vmem %s0, 3
  %s296 = smov 192
  %v297 = vld [vmem:[%s295] ss:$16 sm:%s296]
  %vm298 = vcmask 1047558
  %v299 = vsel %vm298, %v297, %v294
  %300 = vrot.lane.b32.xlu0 %v299, 24
  %v301 = vpop.permute.xlu0 %300
  %vm302 = vcmask 261312
  %303 = vst.msk [vmem:[%s1] sm:$0xff] %vm302, %v301
  %s304 = scalar_lea.vmem %s0, 2
  %s305 = smov 3
  %v306 = vld [vmem:[%s304] ss:$16 sm:%s305]
  %s307 = scalar_lea.vmem %s0, 2
  %s308 = smov 12
  %v309 = vld [vmem:[%s307] ss:$16 sm:%s308]
  %vm310 = vcmask 1043458
  %v311 = vsel %vm310, %v309, %v306
  %s312 = scalar_lea.vmem %s0, 2
  %s313 = smov 48
  %v314 = vld [vmem:[%s312] ss:$16 sm:%s313]
  %vm315 = vcmask 1045508
  %v316 = vsel %vm315, %v314, %v311
  %s317 = scalar_lea.vmem %s0, 2
  %s318 = smov 192
  %v319 = vld [vmem:[%s317] ss:$16 sm:%s318]
  %vm320 = vcmask 1047558
  %v321 = vsel %vm320, %v319, %v316
  %322 = vrot.lane.b32.xlu0 %v321, 16
  %v323 = vpop.permute.xlu0 %322
  %vm324 = vcmask 195712
  %325 = vst.msk [vmem:[%s1] sm:$0xff] %vm324, %v323
  %s326 = scalar_lea.vmem %s0, 1
  %s327 = smov 3
  %v328 = vld [vmem:[%s326] ss:$16 sm:%s327]
  %s329 = scalar_lea.vmem %s0, 1
  %s330 = smov 12
  %v331 = vld [vmem:[%s329] ss:$16 sm:%s330]
  %vm332 = vcmask 1043458
  %v333 = vsel %vm332, %v331, %v328
  %s334 = scalar_lea.vmem %s0, 1
  %s335 = smov 48
  %v336 = vld [vmem:[%s334] ss:$16 sm:%s335]
  %vm337 = vcmask 1045508
  %v338 = vsel %vm337, %v336, %v333
  %s339 = scalar_lea.vmem %s0, 1
  %s340 = smov 192
  %v341 = vld [vmem:[%s339] ss:$16 sm:%s340]
  %vm342 = vcmask 1047558
  %v343 = vsel %vm342, %v341, %v338
  %344 = vrot.lane.b32.xlu0 %v343, 8
  %v345 = vpop.permute.xlu0 %344
  %vm346 = vcmask 130112
  %347 = vst.msk [vmem:[%s1] sm:$0xff] %vm346, %v345

// kernel: tile.28
$region0: #{tile.28}
  #allocation0 [shape = 's32[1]{0}', space=sflag, size = 0x4, scoped, tag = 'scoped memory for tile.28']
  %s0 = inlined_call_operand.vmem [shape: f32[8], index: 0, kind: input, shape index: {}]
  %s1 = inlined_call_operand.vmem [shape: f32[16,8], index: 1, kind: output, shape index: {}]
  // Predicated region
  $region2: #{tile.28} parent=0 // pred_check
    _
  $region3: #{tile.28} parent=0 // pred_check_branch
    %3 = sbr.rel (0) target = $region5
  $region4: #{tile.28} parent=0 // pred_region
    _
  $region5: #{tile.28} parent=0 // pred_fallthru
    _
  %v4 = vld [vmem:[%s0] ss:$0 sm:$0xff]
  %5 = vst [vmem:[%s1] sm:$0xff] %v4
  %s6 = scalar_lea.vmem %s1, 8
  %7 = vst [vmem:[%s6] sm:$0xff] %v4

// kernel: tile.29
$region0: #{tile.29}
  %s0 = inlined_call_operand.vmem [shape: f32[16,8], index: 0, kind: input, shape index: {}]
  %s1 = inlined_call_operand.vmem [shape: f32[1,128], index: 1, kind: output, shape index: {}]
  $region1: #{tile.29} parent=0
    #allocation0 [shape = 'u8[4096]{0}', space=vmem, size = 0x1000, scoped, tag = 'scoped mem for output reshape']
    %v2 = vld [vmem:[%s0] sm:$0x1]
    %vm3 = vcmask 64512
    %4 = vst.msk [vmem:[#allocation0] sm:$0x1] %vm3, %v2
    %s5 = scalar_lea.vmem %s0, 15
    %v6 = vld [vmem:[%s5] sm:$0x1]
    %7 = vrot.lane.b32.xlu0 %v6, 120
    %v8 = vpop.permute.xlu0 %7
    %vm9 = vcmask 1048512
    %10 = vst.msk [vmem:[#allocation0] sm:$0x1] %vm9, %v8
    %s11 = scalar_lea.vmem %s0, 14
    %v12 = vld [vmem:[%s11] sm:$0x1]
    %13 = vrot.lane.b32.xlu0 %v12, 112
    %v14 = vpop.permute.xlu0 %13
    %vm15 = vcmask 982912
    %16 = vst.msk [vmem:[#allocation0] sm:$0x1] %vm15, %v14
    %s17 = scalar_lea.vmem %s0, 13
    %v18 = vld [vmem:[%s17] sm:$0x1]
    %19 = vrot.lane.b32.xlu0 %v18, 104
    %v20 = vpop.permute.xlu0 %19
    %vm21 = vcmask 917312
    %22 = vst.msk [vmem:[#allocation0] sm:$0x1] %vm21, %v20
    %s23 = scalar_lea.vmem %s0, 12
    %v24 = vld [vmem:[%s23] sm:$0x1]
    %25 = vrot.lane.b32.xlu0 %v24, 96
    %v26 = vpop.permute.xlu0 %25
    %vm27 = vcmask 851712
    %28 = vst.msk [vmem:[#allocation0] sm:$0x1] %vm27, %v26
    %s29 = scalar_lea.vmem %s0, 11
    %v30 = vld [vmem:[%s29] sm:$0x1]
    %31 = vrot.lane.b32.xlu0 %v30, 88
    %v32 = vpop.permute.xlu0 %31
    %vm33 = vcmask 786112
    %34 = vst.msk [vmem:[#allocation0] sm:$0x1] %vm33, %v32
    %s35 = scalar_lea.vmem %s0, 10
    %v36 = vld [vmem:[%s35] sm:$0x1]
    %37 = vrot.lane.b32.xlu0 %v36, 80
    %v38 = vpop.permute.xlu0 %37
    %vm39 = vcmask 720512
    %40 = vst.msk [vmem:[#allocation0] sm:$0x1] %vm39, %v38
    %s41 = scalar_lea.vmem %s0, 9
    %v42 = vld [vmem:[%s41] sm:$0x1]
    %43 = vrot.lane.b32.xlu0 %v42, 72
    %v44 = vpop.permute.xlu0 %43
    %vm45 = vcmask 654912
    %46 = vst.msk [vmem:[#allocation0] sm:$0x1] %vm45, %v44
    %s47 = scalar_lea.vmem %s0, 8
    %v48 = vld [vmem:[%s47] sm:$0x1]
    %49 = vrot.lane.b32.xlu0 %v48, 64
    %v50 = vpop.permute.xlu0 %49
    %vm51 = vcmask 589312
    %52 = vst.msk [vmem:[#allocation0] sm:$0x1] %vm51, %v50
    %s53 = scalar_lea.vmem %s0, 7
    %v54 = vld [vmem:[%s53] sm:$0x1]
    %55 = vrot.lane.b32.xlu0 %v54, 56
    %v56 = vpop.permute.xlu0 %55
    %vm57 = vcmask 523712
    %58 = vst.msk [vmem:[#allocation0] sm:$0x1] %vm57, %v56
    %s59 = scalar_lea.vmem %s0, 6
    %v60 = vld [vmem:[%s59] sm:$0x1]
    %61 = vrot.lane.b32.xlu0 %v60, 48
    %v62 = vpop.permute.xlu0 %61
    %vm63 = vcmask 458112
    %64 = vst.msk [vmem:[#allocation0] sm:$0x1] %vm63, %v62
    %s65 = scalar_lea.vmem %s0, 5
    %v66 = vld [vmem:[%s65] sm:$0x1]
    %67 = vrot.lane.b32.xlu0 %v66, 40
    %v68 = vpop.permute.xlu0 %67
    %vm69 = vcmask 392512
    %70 = vst.msk [vmem:[#allocation0] sm:$0x1] %vm69, %v68
    %s71 = scalar_lea.vmem %s0, 4
    %v72 = vld [vmem:[%s71] sm:$0x1]
    %73 = vrot.lane.b32.xlu0 %v72, 32
    %v74 = vpop.permute.xlu0 %73
    %vm75 = vcmask 326912
    %76 = vst.msk [vmem:[#allocation0] sm:$0x1] %vm75, %v74
    %s77 = scalar_lea.vmem %s0, 3
    %v78 = vld [vmem:[%s77] sm:$0x1]
    %79 = vrot.lane.b32.xlu0 %v78, 24
    %v80 = vpop.permute.xlu0 %79
    %vm81 = vcmask 261312
    %82 = vst.msk [vmem:[#allocation0] sm:$0x1] %vm81, %v80
    %s83 = scalar_lea.vmem %s0, 2
    %v84 = vld [vmem:[%s83] sm:$0x1]
    %85 = vrot.lane.b32.xlu0 %v84, 16
    %v86 = vpop.permute.xlu0 %85
    %vm87 = vcmask 195712
    %88 = vst.msk [vmem:[#allocation0] sm:$0x1] %vm87, %v86
    %s89 = scalar_lea.vmem %s0, 1
    %v90 = vld [vmem:[%s89] sm:$0x1]
    %91 = vrot.lane.b32.xlu0 %v90, 8
    %v92 = vpop.permute.xlu0 %91
    %vm93 = vcmask 130112
    %94 = vst.msk [vmem:[#allocation0] sm:$0x1] %vm93, %v92
    %s96 = sshllo.u32 0, 1
    %v98 = vld [vmem:[#allocation0] sm:%s96]
    %s99 = sshllo.u32 0, 1
    %100 = vst [vmem:[%s1] sm:%s99] %v98

// kernel: resblock_pallas.1
$region0: #{resblock_pallas.1}
  #allocation0 [shape = 'u32[]', space=smem, size = 0x4, offset = 0x4, fixed_abs, tag = 'smem constant byte address 0x4 - core index']
  #allocation1 [shape = 'u32[144,128]{1,0:T(1,128)}', space=vmem, size = 0x12000, scoped, tag = 'internal scratch']
  %s0 = inlined_call_operand.vmem [shape: f32[32,128], index: 0, kind: input, shape index: {}]
  %s1 = inlined_call_operand.vmem [shape: f32[32,32], index: 1, kind: input, shape index: {}]
  %s2 = inlined_call_operand.vmem [shape: f32[32,32], index: 2, kind: input, shape index: {}]
  %s3 = inlined_call_operand.vmem [shape: f32[384,128], index: 3, kind: input, shape index: {}]
  %s4 = inlined_call_operand.vmem [shape: f32[1,128], index: 4, kind: input, shape index: {}]
  %s5 = inlined_call_operand.vmem [shape: f32[384,128], index: 5, kind: input, shape index: {}]
  %s6 = inlined_call_operand.vmem [shape: f32[1,128], index: 6, kind: input, shape index: {}]
  %s7 = inlined_call_operand.vmem [shape: f32[128,128], index: 7, kind: input, shape index: {}]
  %s8 = inlined_call_operand.vmem [shape: f32[1,128], index: 8, kind: input, shape index: {}]
  %s9 = inlined_call_operand.vmem [shape: f32[1,8], index: 9, kind: input, shape index: {}]
  %s10 = inlined_call_operand.vmem [shape: f32[1,128], index: 10, kind: input, shape index: {}]
  %s11 = inlined_call_operand.vmem [shape: f32[128,8], index: 11, kind: input, shape index: {}]
  %s12 = inlined_call_operand.vmem [shape: f32[8,128], index: 12, kind: input, shape index: {}]
  %s13 = inlined_call_operand.vmem [shape: f32[32,128], index: 13, kind: output, shape index: {}]
  %s14 = sld [smem:[#allocation0]]
  $region62: #{resblock_pallas.1} parent=0
    _
  %s16 = ssub.s32 1, %s14
  %s17 = scalar_select 0, %s16, %s14
  // Predicated region
  $region2: #{resblock_pallas.1} parent=0 // pred_check
    _
  $region3: #{resblock_pallas.1} parent=0 // pred_check_branch
    %19 = sbr.rel (0) target = $region5
  $region4: #{resblock_pallas.1} parent=0 // pred_region
    _
  $region5: #{resblock_pallas.1} parent=0 // pred_fallthru
    _
  // Predicated region
  $region6: #{resblock_pallas.1} parent=0 // pred_check
    _
  $region7: #{resblock_pallas.1} parent=0 // pred_check_branch
    %21 = sbr.rel (0) target = $region9
  $region8: #{resblock_pallas.1} parent=0 // pred_region
    _
  $region9: #{resblock_pallas.1} parent=0 // pred_fallthru
    _
  // Predicated region
  $region10: #{resblock_pallas.1} parent=0 // pred_check
    _
  $region11: #{resblock_pallas.1} parent=0 // pred_check_branch
    %23 = sbr.rel (0) target = $region13
  $region12: #{resblock_pallas.1} parent=0 // pred_region
    _
  $region13: #{resblock_pallas.1} parent=0 // pred_fallthru
    _
  // Predicated region
  $region14: #{resblock_pallas.1} parent=0 // pred_check
    _
  $region15: #{resblock_pallas.1} parent=0 // pred_check_branch
    %25 = sbr.rel (0) target = $region17
  $region16: #{resblock_pallas.1} parent=0 // pred_region
    _
  $region17: #{resblock_pallas.1} parent=0 // pred_fallthru
    _
  // Predicated region
  $region18: #{resblock_pallas.1} parent=0 // pred_check
    _
  $region19: #{resblock_pallas.1} parent=0 // pred_check_branch
    %27 = sbr.rel (0) target = $region21
  $region20: #{resblock_pallas.1} parent=0 // pred_region
    _
  $region21: #{resblock_pallas.1} parent=0 // pred_fallthru
    _
  // Predicated region
  $region22: #{resblock_pallas.1} parent=0 // pred_check
    _
  $region23: #{resblock_pallas.1} parent=0 // pred_check_branch
    %29 = sbr.rel (0) target = $region25
  $region24: #{resblock_pallas.1} parent=0 // pred_region
    _
  $region25: #{resblock_pallas.1} parent=0 // pred_fallthru
    _
  // Predicated region
  $region26: #{resblock_pallas.1} parent=0 // pred_check
    _
  $region27: #{resblock_pallas.1} parent=0 // pred_check_branch
    %31 = sbr.rel (0) target = $region29
  $region28: #{resblock_pallas.1} parent=0 // pred_region
    _
  $region29: #{resblock_pallas.1} parent=0 // pred_fallthru
    _
  // Predicated region
  $region30: #{resblock_pallas.1} parent=0 // pred_check
    _
  $region31: #{resblock_pallas.1} parent=0 // pred_check_branch
    %33 = sbr.rel (0) target = $region33
  $region32: #{resblock_pallas.1} parent=0 // pred_region
    _
  $region33: #{resblock_pallas.1} parent=0 // pred_fallthru
    _
  // Predicated region
  $region34: #{resblock_pallas.1} parent=0 // pred_check
    _
  $region35: #{resblock_pallas.1} parent=0 // pred_check_branch
    %35 = sbr.rel (0) target = $region37
  $region36: #{resblock_pallas.1} parent=0 // pred_region
    _
  $region37: #{resblock_pallas.1} parent=0 // pred_fallthru
    _
  // Predicated region
  $region38: #{resblock_pallas.1} parent=0 // pred_check
    _
  $region39: #{resblock_pallas.1} parent=0 // pred_check_branch
    %37 = sbr.rel (0) target = $region41
  $region40: #{resblock_pallas.1} parent=0 // pred_region
    _
  $region41: #{resblock_pallas.1} parent=0 // pred_fallthru
    _
  // Predicated region
  $region42: #{resblock_pallas.1} parent=0 // pred_check
    _
  $region43: #{resblock_pallas.1} parent=0 // pred_check_branch
    %39 = sbr.rel (0) target = $region45
  $region44: #{resblock_pallas.1} parent=0 // pred_region
    _
  $region45: #{resblock_pallas.1} parent=0 // pred_fallthru
    _
  // Predicated region
  $region46: #{resblock_pallas.1} parent=0 // pred_check
    _
  $region47: #{resblock_pallas.1} parent=0 // pred_check_branch
    %41 = sbr.rel (0) target = $region49
  $region48: #{resblock_pallas.1} parent=0 // pred_region
    _
  $region49: #{resblock_pallas.1} parent=0 // pred_fallthru
    _
  // Predicated region
  $region50: #{resblock_pallas.1} parent=0 // pred_check
    _
  $region51: #{resblock_pallas.1} parent=0 // pred_check_branch
    %43 = sbr.rel (0) target = $region53
  $region52: #{resblock_pallas.1} parent=0 // pred_region
    _
  $region53: #{resblock_pallas.1} parent=0 // pred_fallthru
    _
  %v44 = vld [vmem:[%s1] sm:$0xff]
  %v45 = vld [vmem:[%s1 + $0x8] sm:$0xff]
  %v46 = vld [vmem:[%s1 + $0x10] sm:$0xff]
  %v47 = vld [vmem:[%s1 + $0x18] sm:$0xff]
  %v48 = vld [vmem:[%s2] sm:$0xff]
  %v49 = vld [vmem:[%s2 + $0x8] sm:$0xff]
  %v50 = vld [vmem:[%s2 + $0x10] sm:$0xff]
  %v51 = vld [vmem:[%s2 + $0x18] sm:$0xff]
  %v52 = vld [vmem:[%s11] sm:$0xff]
  %v53 = vld [vmem:[%s11 + $0x8] sm:$0xff]
  %v54 = vld [vmem:[%s11 + $0x10] sm:$0xff]
  %v55 = vld [vmem:[%s11 + $0x18] sm:$0xff]
  %v56 = vld [vmem:[%s11 + $0x20] sm:$0xff]
  %v57 = vld [vmem:[%s11 + $0x28] sm:$0xff]
  %v58 = vld [vmem:[%s11 + $0x30] sm:$0xff]
  %v59 = vld [vmem:[%s11 + $0x38] sm:$0xff]
  %v60 = vld [vmem:[%s11 + $0x40] sm:$0xff]
  %v61 = vld [vmem:[%s11 + $0x48] sm:$0xff]
  %v62 = vld [vmem:[%s11 + $0x50] sm:$0xff]
  %v63 = vld [vmem:[%s11 + $0x58] sm:$0xff]
  %v64 = vld [vmem:[%s11 + $0x60] sm:$0xff]
  %v65 = vld [vmem:[%s11 + $0x68] sm:$0xff]
  %v66 = vld [vmem:[%s11 + $0x70] sm:$0xff]
  %v67 = vld [vmem:[%s11 + $0x78] sm:$0xff]
  %v68 = vld [vmem:[%s12] sm:$0xff]
  %v69 = vld [vmem:[%s9] sm:$0x1]
  %v70 = vld [vmem:[%s10] sm:$0x1]
  %v71 = vld [vmem:[%s0] sm:$0xff]
  %v72 = vld [vmem:[%s0 + $0x8] sm:$0xff]
  %v73 = vld [vmem:[%s0 + $0x10] sm:$0xff]
  %v74 = vld [vmem:[%s0 + $0x18] sm:$0xff]
  %vm75 = vcmask 261120
  %v77 = vsel %vm75, %v44, 0
  %v80 = vsel %vm75, %v45, 0
  %v83 = vsel %vm75, %v46, 0
  %v86 = vsel %vm75, %v47, 0
  %88 = vmatprep.subr.mxu0 0.0
  %89 = vmatpush1.msra.mxu0 %v71
  %90 = vmatprep.subr.mxu0 0.0
  %91 = vmatpush1.msra.mxu0 %v72
  %92 = vmatprep.subr.mxu0 0.0
  %93 = vmatpush1.msra.mxu0 %v73
  %94 = vmatprep.subr.mxu0 0.0
  %95 = vmatpush1.msra.mxu0 %v74
  %96 = vmatprep.subr.mxu0 0.0
  %97 = vmatpush1.msra.mxu0 0.0
  %98 = vmatprep.subr.mxu0 0.0
  %99 = vmatpush1.msra.mxu0 0.0
  %100 = vmatprep.subr.mxu0 0.0
  %101 = vmatpush1.msra.mxu0 0.0
  %102 = vmatprep.subr.mxu0 0.0
  %103 = vmatpush1.msra.mxu0 0.0
  %104 = vmatprep.subr.mxu0 0.0
  %105 = vmatpush1.msra.mxu0 0.0
  %106 = vmatprep.subr.mxu0 0.0
  %107 = vmatpush1.msra.mxu0 0.0
  %108 = vmatprep.subr.mxu0 0.0
  %109 = vmatpush1.msra.mxu0 0.0
  %110 = vmatprep.subr.mxu0 0.0
  %111 = vmatpush1.msra.mxu0 0.0
  %112 = vmatprep.subr.mxu0 0.0
  %113 = vmatpush1.msra.mxu0 0.0
  %114 = vmatprep.subr.mxu0 0.0
  %115 = vmatpush1.msra.mxu0 0.0
  %116 = vmatprep.subr.mxu0 0.0
  %117 = vmatpush1.msra.mxu0 0.0
  %118 = vmatprep.subr.mxu0 0.0
  %119 = vmatpush1.msra.mxu0 0.0
  %120 = vmatprep.subr.mxu0 0.0
  %121 = vmatpush1.msra.mxu0 0.0
  %122 = vmatprep.subr.mxu0 0.0
  %123 = vmatpush1.msra.mxu0 0.0
  %124 = vmatprep.subr.mxu0 0.0
  %125 = vmatpush1.msra.mxu0 0.0
  %126 = vmatprep.subr.mxu0 0.0
  %127 = vmatpush1.msra.mxu0 0.0
  %128 = vmatprep.subr.mxu0 0.0
  %129 = vmatpush1.msra.mxu0 0.0
  %130 = vmatprep.subr.mxu0 0.0
  %131 = vmatpush1.msra.mxu0 0.0
  %132 = vmatprep.subr.mxu0 0.0
  %133 = vmatpush1.msra.mxu0 0.0
  %134 = vmatprep.subr.mxu0 0.0
  %135 = vmatpush1.msra.mxu0 0.0
  %136 = vmatprep.subr.mxu0 0.0
  %137 = vmatpush1.msra.mxu0 0.0
  %138 = vmatprep.subr.mxu0 0.0
  %139 = vmatpush1.msra.mxu0 0.0
  %140 = vmatprep.subr.mxu0 0.0
  %141 = vmatpush1.msra.mxu0 0.0
  %142 = vmatprep.subr.mxu0 0.0
  %143 = vmatpush1.msra.mxu0 0.0
  %144 = vmatprep.subr.mxu0 0.0
  %145 = vmatpush1.msra.mxu0 0.0
  %146 = vmatprep.subr.mxu0 0.0
  %147 = vmatpush1.msra.mxu0 0.0
  %148 = vmatprep.subr.mxu0 0.0
  %149 = vmatpush1.msra.mxu0 0.0
  %150 = vmatprep.subr.mxu0 0.0
  %151 = vmatpush1.msra.mxu0 0.0
  %152 = vmatprep.mubr.f32.mxu0 0.0
  %153 = vmatmul.mubr.f32.gmra.mrb[0].mxu0 %v77
  %v154 = vpop.f32.mrb[0].mxu0
  %v155 = vadd.f32 0.0, %v154
  %v156 = vpop.f32.mrb[0].mxu0
  %157 = vmatprep.mubr.f32.mxu0 0.0
  %158 = vmatmul.mubr.f32.gmra.mrb[0].mxu0 %v80
  %v159 = vpop.f32.mrb[0].mxu0
  %v160 = vadd.f32 0.0, %v159
  %v161 = vpop.f32.mrb[0].mxu0
  %162 = vmatprep.mubr.f32.mxu0 0.0
  %163 = vmatmul.mubr.f32.gmra.mrb[0].mxu0 %v83
  %v164 = vpop.f32.mrb[0].mxu0
  %v165 = vadd.f32 0.0, %v164
  %v166 = vpop.f32.mrb[0].mxu0
  %167 = vmatprep.mubr.f32.mxu0 0.0
  %168 = vmatmul.mubr.f32.gmra.mrb[0].mxu0 %v86
  %v169 = vpop.f32.mrb[0].mxu0
  %v170 = vadd.f32 0.0, %v169
  %v171 = vpop.f32.mrb[0].mxu0
  %172 = vdwg.mxu0
  %v174 = vsel %vm75, %v48, 0
  %v177 = vsel %vm75, %v49, 0
  %v180 = vsel %vm75, %v50, 0
  %v183 = vsel %vm75, %v51, 0
  %185 = vmatprep.subr.mxu0 0.0
  %186 = vmatpush1.msra.mxu0 %v71
  %187 = vmatprep.subr.mxu0 0.0
  %188 = vmatpush1.msra.mxu0 %v72
  %189 = vmatprep.subr.mxu0 0.0
  %190 = vmatpush1.msra.mxu0 %v73
  %191 = vmatprep.subr.mxu0 0.0
  %192 = vmatpush1.msra.mxu0 %v74
  %193 = vmatprep.subr.mxu0 0.0
  %194 = vmatpush1.msra.mxu0 0.0
  %195 = vmatprep.subr.mxu0 0.0
  %196 = vmatpush1.msra.mxu0 0.0
  %197 = vmatprep.subr.mxu0 0.0
  %198 = vmatpush1.msra.mxu0 0.0
  %199 = vmatprep.subr.mxu0 0.0
  %200 = vmatpush1.msra.mxu0 0.0
  %201 = vmatprep.subr.mxu0 0.0
  %202 = vmatpush1.msra.mxu0 0.0
  %203 = vmatprep.subr.mxu0 0.0
  %204 = vmatpush1.msra.mxu0 0.0
  %205 = vmatprep.subr.mxu0 0.0
  %206 = vmatpush1.msra.mxu0 0.0
  %207 = vmatprep.subr.mxu0 0.0
  %208 = vmatpush1.msra.mxu0 0.0
  %209 = vmatprep.subr.mxu0 0.0
  %210 = vmatpush1.msra.mxu0 0.0
  %211 = vmatprep.subr.mxu0 0.0
  %212 = vmatpush1.msra.mxu0 0.0
  %213 = vmatprep.subr.mxu0 0.0
  %214 = vmatpush1.msra.mxu0 0.0
  %215 = vmatprep.subr.mxu0 0.0
  %216 = vmatpush1.msra.mxu0 0.0
  %217 = vmatprep.subr.mxu0 0.0
  %218 = vmatpush1.msra.mxu0 0.0
  %219 = vmatprep.subr.mxu0 0.0
  %220 = vmatpush1.msra.mxu0 0.0
  %221 = vmatprep.subr.mxu0 0.0
  %222 = vmatpush1.msra.mxu0 0.0
  %223 = vmatprep.subr.mxu0 0.0
  %224 = vmatpush1.msra.mxu0 0.0
  %225 = vmatprep.subr.mxu0 0.0
  %226 = vmatpush1.msra.mxu0 0.0
  %227 = vmatprep.subr.mxu0 0.0
  %228 = vmatpush1.msra.mxu0 0.0
  %229 = vmatprep.subr.mxu0 0.0
  %230 = vmatpush1.msra.mxu0 0.0
  %231 = vmatprep.subr.mxu0 0.0
  %232 = vmatpush1.msra.mxu0 0.0
  %233 = vmatprep.subr.mxu0 0.0
  %234 = vmatpush1.msra.mxu0 0.0
  %235 = vmatprep.subr.mxu0 0.0
  %236 = vmatpush1.msra.mxu0 0.0
  %237 = vmatprep.subr.mxu0 0.0
  %238 = vmatpush1.msra.mxu0 0.0
  %239 = vmatprep.subr.mxu0 0.0
  %240 = vmatpush1.msra.mxu0 0.0
  %241 = vmatprep.subr.mxu0 0.0
  %242 = vmatpush1.msra.mxu0 0.0
  %243 = vmatprep.subr.mxu0 0.0
  %244 = vmatpush1.msra.mxu0 0.0
  %245 = vmatprep.subr.mxu0 0.0
  %246 = vmatpush1.msra.mxu0 0.0
  %247 = vmatprep.subr.mxu0 0.0
  %248 = vmatpush1.msra.mxu0 0.0
  %249 = vmatprep.mubr.f32.mxu0 0.0
  %250 = vmatmul.mubr.f32.gmra.mrb[0].mxu0 %v174
  %v251 = vpop.f32.mrb[0].mxu0
  %v252 = vadd.f32 0.0, %v251
  %v253 = vpop.f32.mrb[0].mxu0
  %254 = vmatprep.mubr.f32.mxu0 0.0
  %255 = vmatmul.mubr.f32.gmra.mrb[0].mxu0 %v177
  %v256 = vpop.f32.mrb[0].mxu0
  %v257 = vadd.f32 0.0, %v256
  %v258 = vpop.f32.mrb[0].mxu0
  %259 = vmatprep.mubr.f32.mxu0 0.0
  %260 = vmatmul.mubr.f32.gmra.mrb[0].mxu0 %v180
  %v261 = vpop.f32.mrb[0].mxu0
  %v262 = vadd.f32 0.0, %v261
  %v263 = vpop.f32.mrb[0].mxu0
  %264 = vmatprep.mubr.f32.mxu0 0.0
  %265 = vmatmul.mubr.f32.gmra.mrb[0].mxu0 %v183
  %v266 = vpop.f32.mrb[0].mxu0
  %v267 = vadd.f32 0.0, %v266
  %v268 = vpop.f32.mrb[0].mxu0
  %269 = vdwg.mxu0
  %v270 = vld [vmem:[%s3] sm:$0xff]
  %v271 = vld [vmem:[%s3 + $0x8] sm:$0xff]
  %v272 = vld [vmem:[%s3 + $0x10] sm:$0xff]
  %v273 = vld [vmem:[%s3 + $0x18] sm:$0xff]
  %v274 = vld [vmem:[%s3 + $0x20] sm:$0xff]
  %v275 = vld [vmem:[%s3 + $0x28] sm:$0xff]
  %v276 = vld [vmem:[%s3 + $0x30] sm:$0xff]
  %v277 = vld [vmem:[%s3 + $0x38] sm:$0xff]
  %v278 = vld [vmem:[%s3 + $0x40] sm:$0xff]
  %v279 = vld [vmem:[%s3 + $0x48] sm:$0xff]
  %v280 = vld [vmem:[%s3 + $0x50] sm:$0xff]
  %v281 = vld [vmem:[%s3 + $0x58] sm:$0xff]
  %v282 = vld [vmem:[%s3 + $0x60] sm:$0xff]
  %v283 = vld [vmem:[%s3 + $0x68] sm:$0xff]
  %v284 = vld [vmem:[%s3 + $0x70] sm:$0xff]
  %v285 = vld [vmem:[%s3 + $0x78] sm:$0xff]
  %v286 = vld [vmem:[%s3 + $0x80] sm:$0xff]
  %v287 = vld [vmem:[%s3 + $0x88] sm:$0xff]
  %v288 = vld [vmem:[%s3 + $0x90] sm:$0xff]
  %v289 = vld [vmem:[%s3 + $0x98] sm:$0xff]
  %v290 = vld [vmem:[%s3 + $0xa0] sm:$0xff]
  %v291 = vld [vmem:[%s3 + $0xa8] sm:$0xff]
  %v292 = vld [vmem:[%s3 + $0xb0] sm:$0xff]
  %v293 = vld [vmem:[%s3 + $0xb8] sm:$0xff]
  %v294 = vld [vmem:[%s3 + $0xc0] sm:$0xff]
  %v295 = vld [vmem:[%s3 + $0xc8] sm:$0xff]
  %v296 = vld [vmem:[%s3 + $0xd0] sm:$0xff]
  %v297 = vld [vmem:[%s3 + $0xd8] sm:$0xff]
  %v298 = vld [vmem:[%s3 + $0xe0] sm:$0xff]
  %v299 = vld [vmem:[%s3 + $0xe8] sm:$0xff]
  %v300 = vld [vmem:[%s3 + $0xf0] sm:$0xff]
  %v301 = vld [vmem:[%s3 + $0xf8] sm:$0xff]
  %v302 = vld [vmem:[%s3 + $0x100] sm:$0xff]
  %v303 = vld [vmem:[%s3 + $0x108] sm:$0xff]
  %v304 = vld [vmem:[%s3 + $0x110] sm:$0xff]
  %v305 = vld [vmem:[%s3 + $0x118] sm:$0xff]
  %v306 = vld [vmem:[%s3 + $0x120] sm:$0xff]
  %v307 = vld [vmem:[%s3 + $0x128] sm:$0xff]
  %v308 = vld [vmem:[%s3 + $0x130] sm:$0xff]
  %v309 = vld [vmem:[%s3 + $0x138] sm:$0xff]
  %v310 = vld [vmem:[%s3 + $0x140] sm:$0xff]
  %v311 = vld [vmem:[%s3 + $0x148] sm:$0xff]
  %v312 = vld [vmem:[%s3 + $0x150] sm:$0xff]
  %v313 = vld [vmem:[%s3 + $0x158] sm:$0xff]
  %v314 = vld [vmem:[%s3 + $0x160] sm:$0xff]
  %v315 = vld [vmem:[%s3 + $0x168] sm:$0xff]
  %v316 = vld [vmem:[%s3 + $0x170] sm:$0xff]
  %v317 = vld [vmem:[%s3 + $0x178] sm:$0xff]
  %v318 = vld [vmem:[%s4] sm:$0x1]
  %v320 = vlaneseq
  %v321 = vshrl.u32 %v320, 7
  %v322 = vsub.s32 0, %v321
  %v323 = vrot.slane %v318, %v322
  %325 = vmatprep.subr.mxu0 0.0
  %326 = vmatpush1.msra.mxu0 %v270
  %327 = vmatprep.subr.mxu0 0.0
  %328 = vmatpush1.msra.mxu0 %v271
  %329 = vmatprep.subr.mxu0 0.0
  %330 = vmatpush1.msra.mxu0 %v272
  %331 = vmatprep.subr.mxu0 0.0
  %332 = vmatpush1.msra.mxu0 %v273
  %333 = vmatprep.subr.mxu0 0.0
  %334 = vmatpush1.msra.mxu0 %v274
  %335 = vmatprep.subr.mxu0 0.0
  %336 = vmatpush1.msra.mxu0 %v275
  %337 = vmatprep.subr.mxu0 0.0
  %338 = vmatpush1.msra.mxu0 %v276
  %339 = vmatprep.subr.mxu0 0.0
  %340 = vmatpush1.msra.mxu0 %v277
  %341 = vmatprep.subr.mxu0 0.0
  %342 = vmatpush1.msra.mxu0 %v278
  %343 = vmatprep.subr.mxu0 0.0
  %344 = vmatpush1.msra.mxu0 %v279
  %345 = vmatprep.subr.mxu0 0.0
  %346 = vmatpush1.msra.mxu0 %v280
  %347 = vmatprep.subr.mxu0 0.0
  %348 = vmatpush1.msra.mxu0 %v281
  %349 = vmatprep.subr.mxu0 0.0
  %350 = vmatpush1.msra.mxu0 %v282
  %351 = vmatprep.subr.mxu0 0.0
  %352 = vmatpush1.msra.mxu0 %v283
  %353 = vmatprep.subr.mxu0 0.0
  %354 = vmatpush1.msra.mxu0 %v284
  %355 = vmatprep.subr.mxu0 0.0
  %356 = vmatpush1.msra.mxu0 %v285
  %357 = vmatprep.subr.mxu0 0.0
  %358 = vmatpush1.msra.mxu0 %v286
  %359 = vmatprep.subr.mxu0 0.0
  %360 = vmatpush1.msra.mxu0 %v287
  %361 = vmatprep.subr.mxu0 0.0
  %362 = vmatpush1.msra.mxu0 %v288
  %363 = vmatprep.subr.mxu0 0.0
  %364 = vmatpush1.msra.mxu0 %v289
  %365 = vmatprep.subr.mxu0 0.0
  %366 = vmatpush1.msra.mxu0 %v290
  %367 = vmatprep.subr.mxu0 0.0
  %368 = vmatpush1.msra.mxu0 %v291
  %369 = vmatprep.subr.mxu0 0.0
  %370 = vmatpush1.msra.mxu0 %v292
  %371 = vmatprep.subr.mxu0 0.0
  %372 = vmatpush1.msra.mxu0 %v293
  %373 = vmatprep.subr.mxu0 0.0
  %374 = vmatpush1.msra.mxu0 %v294
  %375 = vmatprep.subr.mxu0 0.0
  %376 = vmatpush1.msra.mxu0 %v295
  %377 = vmatprep.subr.mxu0 0.0
  %378 = vmatpush1.msra.mxu0 %v296
  %379 = vmatprep.subr.mxu0 0.0
  %380 = vmatpush1.msra.mxu0 %v297
  %381 = vmatprep.subr.mxu0 0.0
  %382 = vmatpush1.msra.mxu0 %v298
  %383 = vmatprep.subr.mxu0 0.0
  %384 = vmatpush1.msra.mxu0 %v299
  %385 = vmatprep.subr.mxu0 0.0
  %386 = vmatpush1.msra.mxu0 %v300
  %387 = vmatprep.subr.mxu0 0.0
  %388 = vmatpush1.msra.mxu0 %v301
  %389 = vmatprep.mubr.f32.mxu0 %v71
  %390 = vmatmul.mubr.f32.gmra.mrb[0].mxu0 %v155
  %v391 = vpop.f32.mrb[0].mxu0
  %v392 = vadd.f32 %v323, %v391
  %v393 = vpop.f32.mrb[0].mxu0
  %394 = vmatprep.mubr.f32.mxu0 %v72
  %395 = vmatmul.mubr.f32.gmra.mrb[0].mxu0 %v160
  %v396 = vpop.f32.mrb[0].mxu0
  %v397 = vadd.f32 %v323, %v396
  %v398 = vpop.f32.mrb[0].mxu0
  %399 = vmatprep.mubr.f32.mxu0 %v73
  %400 = vmatmul.mubr.f32.gmra.mrb[0].mxu0 %v165
  %v401 = vpop.f32.mrb[0].mxu0
  %v402 = vadd.f32 %v323, %v401
  %v403 = vpop.f32.mrb[0].mxu0
  %404 = vmatprep.mubr.f32.mxu0 %v74
  %405 = vmatmul.mubr.f32.gmra.mrb[0].mxu0 %v170
  %v406 = vpop.f32.mrb[0].mxu0
  %v407 = vadd.f32 %v323, %v406
  %v408 = vpop.f32.mrb[0].mxu0
  %409 = vdwg.mxu0
  %410 = vmatprep.subr.mxu0 0.0
  %411 = vmatpush1.msra.mxu0 %v302
  %412 = vmatprep.subr.mxu0 0.0
  %413 = vmatpush1.msra.mxu0 %v303
  %414 = vmatprep.subr.mxu0 0.0
  %415 = vmatpush1.msra.mxu0 %v304
  %416 = vmatprep.subr.mxu0 0.0
  %417 = vmatpush1.msra.mxu0 %v305
  %418 = vmatprep.subr.mxu0 0.0
  %419 = vmatpush1.msra.mxu0 %v306
  %420 = vmatprep.subr.mxu0 0.0
  %421 = vmatpush1.msra.mxu0 %v307
  %422 = vmatprep.subr.mxu0 0.0
  %423 = vmatpush1.msra.mxu0 %v308
  %424 = vmatprep.subr.mxu0 0.0
  %425 = vmatpush1.msra.mxu0 %v309
  %426 = vmatprep.subr.mxu0 0.0
  %427 = vmatpush1.msra.mxu0 %v310
  %428 = vmatprep.subr.mxu0 0.0
  %429 = vmatpush1.msra.mxu0 %v311
  %430 = vmatprep.subr.mxu0 0.0
  %431 = vmatpush1.msra.mxu0 %v312
  %432 = vmatprep.subr.mxu0 0.0
  %433 = vmatpush1.msra.mxu0 %v313
  %434 = vmatprep.subr.mxu0 0.0
  %435 = vmatpush1.msra.mxu0 %v314
  %436 = vmatprep.subr.mxu0 0.0
  %437 = vmatpush1.msra.mxu0 %v315
  %438 = vmatprep.subr.mxu0 0.0
  %439 = vmatpush1.msra.mxu0 %v316
  %440 = vmatprep.subr.mxu0 0.0
  %441 = vmatpush1.msra.mxu0 %v317
  %442 = vmatprep.subr.mxu0 0.0
  %443 = vmatpush1.msra.mxu0 0.0
  %444 = vmatprep.subr.mxu0 0.0
  %445 = vmatpush1.msra.mxu0 0.0
  %446 = vmatprep.subr.mxu0 0.0
  %447 = vmatpush1.msra.mxu0 0.0
  %448 = vmatprep.subr.mxu0 0.0
  %449 = vmatpush1.msra.mxu0 0.0
  %450 = vmatprep.subr.mxu0 0.0
  %451 = vmatpush1.msra.mxu0 0.0
  %452 = vmatprep.subr.mxu0 0.0
  %453 = vmatpush1.msra.mxu0 0.0
  %454 = vmatprep.subr.mxu0 0.0
  %455 = vmatpush1.msra.mxu0 0.0
  %456 = vmatprep.subr.mxu0 0.0
  %457 = vmatpush1.msra.mxu0 0.0
  %458 = vmatprep.subr.mxu0 0.0
  %459 = vmatpush1.msra.mxu0 0.0
  %460 = vmatprep.subr.mxu0 0.0
  %461 = vmatpush1.msra.mxu0 0.0
  %462 = vmatprep.subr.mxu0 0.0
  %463 = vmatpush1.msra.mxu0 0.0
  %464 = vmatprep.subr.mxu0 0.0
  %465 = vmatpush1.msra.mxu0 0.0
  %466 = vmatprep.subr.mxu0 0.0
  %467 = vmatpush1.msra.mxu0 0.0
  %468 = vmatprep.subr.mxu0 0.0
  %469 = vmatpush1.msra.mxu0 0.0
  %470 = vmatprep.subr.mxu0 0.0
  %471 = vmatpush1.msra.mxu0 0.0
  %472 = vmatprep.subr.mxu0 0.0
  %473 = vmatpush1.msra.mxu0 0.0
  %474 = vmatprep.mubr.f32.mxu0 0.0
  %475 = vmatmul.mubr.f32.gmra.mrb[0].mxu0 %v252
  %v476 = vpop.f32.mrb[0].mxu0
  %v477 = vadd.f32 %v392, %v476
  %v478 = vpop.f32.mrb[0].mxu0
  %479 = vmatprep.mubr.f32.mxu0 0.0
  %480 = vmatmul.mubr.f32.gmra.mrb[0].mxu0 %v257
  %v481 = vpop.f32.mrb[0].mxu0
  %v482 = vadd.f32 %v397, %v481
  %v483 = vpop.f32.mrb[0].mxu0
  %484 = vmatprep.mubr.f32.mxu0 0.0
  %485 = vmatmul.mubr.f32.gmra.mrb[0].mxu0 %v262
  %v486 = vpop.f32.mrb[0].mxu0
  %v487 = vadd.f32 %v402, %v486
  %v488 = vpop.f32.mrb[0].mxu0
  %489 = vmatprep.mubr.f32.mxu0 0.0
  %490 = vmatmul.mubr.f32.gmra.mrb[0].mxu0 %v267
  %v491 = vpop.f32.mrb[0].mxu0
  %v492 = vadd.f32 %v407, %v491
  %v493 = vpop.f32.mrb[0].mxu0
  %494 = vdwg.mxu0
  %v495 = vadd.f32 %v477, %v482
  %v496 = vadd.f32 %v495, %v487
  %v497 = vadd.f32 %v496, %v492
  %v498 = vrot.slane %v497, 4
  %v499 = vadd.f32 %v497, %v498
  %v500 = vrot.slane %v499, 2
  %v501 = vadd.f32 %v499, %v500
  %v502 = vrot.slane %v501, 1
  %v503 = vadd.f32 %v501, %v502
  %504 = vmatprep.subr.mxu0 0.0
  %505 = vmatpush1.msra.mxu0 %v52
  %506 = vmatprep.subr.mxu0 0.0
  %507 = vmatpush1.msra.mxu0 %v53
  %508 = vmatprep.subr.mxu0 0.0
  %509 = vmatpush1.msra.mxu0 %v54
  %510 = vmatprep.subr.mxu0 0.0
  %511 = vmatpush1.msra.mxu0 %v55
  %512 = vmatprep.subr.mxu0 0.0
  %513 = vmatpush1.msra.mxu0 %v56
  %514 = vmatprep.subr.mxu0 0.0
  %515 = vmatpush1.msra.mxu0 %v57
  %516 = vmatprep.subr.mxu0 0.0
  %517 = vmatpush1.msra.mxu0 %v58
  %518 = vmatprep.subr.mxu0 0.0
  %519 = vmatpush1.msra.mxu0 %v59
  %520 = vmatprep.subr.mxu0 0.0
  %521 = vmatpush1.msra.mxu0 %v60
  %522 = vmatprep.subr.mxu0 0.0
  %523 = vmatpush1.msra.mxu0 %v61
  %524 = vmatprep.subr.mxu0 0.0
  %525 = vmatpush1.msra.mxu0 %v62
  %526 = vmatprep.subr.mxu0 0.0
  %527 = vmatpush1.msra.mxu0 %v63
  %528 = vmatprep.subr.mxu0 0.0
  %529 = vmatpush1.msra.mxu0 %v64
  %530 = vmatprep.subr.mxu0 0.0
  %531 = vmatpush1.msra.mxu0 %v65
  %532 = vmatprep.subr.mxu0 0.0
  %533 = vmatpush1.msra.mxu0 %v66
  %534 = vmatprep.subr.mxu0 0.0
  %535 = vmatpush1.msra.mxu0 %v67
  %536 = vmatprep.subr.mxu0 0.0
  %537 = vmatpush1.msra.mxu0 0.0
  %538 = vmatprep.subr.mxu0 0.0
  %539 = vmatpush1.msra.mxu0 0.0
  %540 = vmatprep.subr.mxu0 0.0
  %541 = vmatpush1.msra.mxu0 0.0
  %542 = vmatprep.subr.mxu0 0.0
  %543 = vmatpush1.msra.mxu0 0.0
  %544 = vmatprep.subr.mxu0 0.0
  %545 = vmatpush1.msra.mxu0 0.0
  %546 = vmatprep.subr.mxu0 0.0
  %547 = vmatpush1.msra.mxu0 0.0
  %548 = vmatprep.subr.mxu0 0.0
  %549 = vmatpush1.msra.mxu0 0.0
  %550 = vmatprep.subr.mxu0 0.0
  %551 = vmatpush1.msra.mxu0 0.0
  %552 = vmatprep.subr.mxu0 0.0
  %553 = vmatpush1.msra.mxu0 0.0
  %554 = vmatprep.subr.mxu0 0.0
  %555 = vmatpush1.msra.mxu0 0.0
  %556 = vmatprep.subr.mxu0 0.0
  %557 = vmatpush1.msra.mxu0 0.0
  %558 = vmatprep.subr.mxu0 0.0
  %559 = vmatpush1.msra.mxu0 0.0
  %560 = vmatprep.subr.mxu0 0.0
  %561 = vmatpush1.msra.mxu0 0.0
  %562 = vmatprep.subr.mxu0 0.0
  %563 = vmatpush1.msra.mxu0 0.0
  %564 = vmatprep.subr.mxu0 0.0
  %565 = vmatpush1.msra.mxu0 0.0
  %566 = vmatprep.subr.mxu0 0.0
  %567 = vmatpush1.msra.mxu0 0.0
  %568 = vmatprep.mubr.f32.mxu0 0.0
  %569 = vmatmul.mubr.f32.gmra.mrb[0].mxu0 %v503
  %v570 = vpop.f32.mrb[0].mxu0
  %v571 = vadd.f32 0.0, %v570
  %v572 = vpop.f32.mrb[0].mxu0
  %573 = vdwg.mxu0
  %v574 = vmul.f32 %v571, 0.001953125
  %vm575 = vcmask 64512
  %v577 = vsel %vm575, %v574, 0
  %579 = vmatprep.subr.mxu0 0.0
  %580 = vmatpush1.msra.mxu0 %v68
  %581 = vmatprep.subr.mxu0 0.0
  %582 = vmatpush1.msra.mxu0 0.0
  %583 = vmatprep.subr.mxu0 0.0
  %584 = vmatpush1.msra.mxu0 0.0
  %585 = vmatprep.subr.mxu0 0.0
  %586 = vmatpush1.msra.mxu0 0.0
  %587 = vmatprep.subr.mxu0 0.0
  %588 = vmatpush1.msra.mxu0 0.0
  %589 = vmatprep.subr.mxu0 0.0
  %590 = vmatpush1.msra.mxu0 0.0
  %591 = vmatprep.subr.mxu0 0.0
  %592 = vmatpush1.msra.mxu0 0.0
  %593 = vmatprep.subr.mxu0 0.0
  %594 = vmatpush1.msra.mxu0 0.0
  %595 = vmatprep.subr.mxu0 0.0
  %596 = vmatpush1.msra.mxu0 0.0
  %597 = vmatprep.subr.mxu0 0.0
  %598 = vmatpush1.msra.mxu0 0.0
  %599 = vmatprep.subr.mxu0 0.0
  %600 = vmatpush1.msra.mxu0 0.0
  %601 = vmatprep.subr.mxu0 0.0
  %602 = vmatpush1.msra.mxu0 0.0
  %603 = vmatprep.subr.mxu0 0.0
  %604 = vmatpush1.msra.mxu0 0.0
  %605 = vmatprep.subr.mxu0 0.0
  %606 = vmatpush1.msra.mxu0 0.0
  %607 = vmatprep.subr.mxu0 0.0
  %608 = vmatpush1.msra.mxu0 0.0
  %609 = vmatprep.subr.mxu0 0.0
  %610 = vmatpush1.msra.mxu0 0.0
  %611 = vmatprep.subr.mxu0 0.0
  %612 = vmatpush1.msra.mxu0 0.0
  %613 = vmatprep.subr.mxu0 0.0
  %614 = vmatpush1.msra.mxu0 0.0
  %615 = vmatprep.subr.mxu0 0.0
  %616 = vmatpush1.msra.mxu0 0.0
  %617 = vmatprep.subr.mxu0 0.0
  %618 = vmatpush1.msra.mxu0 0.0
  %619 = vmatprep.subr.mxu0 0.0
  %620 = vmatpush1.msra.mxu0 0.0
  %621 = vmatprep.subr.mxu0 0.0
  %622 = vmatpush1.msra.mxu0 0.0
  %623 = vmatprep.subr.mxu0 0.0
  %624 = vmatpush1.msra.mxu0 0.0
  %625 = vmatprep.subr.mxu0 0.0
  %626 = vmatpush1.msra.mxu0 0.0
  %627 = vmatprep.subr.mxu0 0.0
  %628 = vmatpush1.msra.mxu0 0.0
  %629 = vmatprep.subr.mxu0 0.0
  %630 = vmatpush1.msra.mxu0 0.0
  %631 = vmatprep.subr.mxu0 0.0
  %632 = vmatpush1.msra.mxu0 0.0
  %633 = vmatprep.subr.mxu0 0.0
  %634 = vmatpush1.msra.mxu0 0.0
  %635 = vmatprep.subr.mxu0 0.0
  %636 = vmatpush1.msra.mxu0 0.0
  %637 = vmatprep.subr.mxu0 0.0
  %638 = vmatpush1.msra.mxu0 0.0
  %639 = vmatprep.subr.mxu0 0.0
  %640 = vmatpush1.msra.mxu0 0.0
  %641 = vmatprep.subr.mxu0 0.0
  %642 = vmatpush1.msra.mxu0 0.0
  %643 = vmatprep.mubr.f32.mxu0 0.0
  %644 = vmatmul.mubr.f32.gmra.mrb[0].mxu0 %v577
  %v645 = vpop.f32.mrb[0].mxu0
  %v646 = vadd.f32 0.0, %v645
  %v647 = vpop.f32.mrb[0].mxu0
  %648 = vdwg.mxu0
  %v649 = vlaneseq
  %v650 = vshrl.u32 %v649, 7
  %v651 = vsub.s32 0, %v650
  %v652 = vrot.slane %v646, %v651
  %v653 = vsub.f32 %v477, %v652
  %v654 = vsub.f32 %v482, %v652
  %v655 = vsub.f32 %v487, %v652
  %v656 = vsub.f32 %v492, %v652
  %v657 = vmul.f32 %v653, %v653
  %v658 = vmul.f32 %v654, %v654
  %v659 = vmul.f32 %v655, %v655
  %v660 = vmul.f32 %v656, %v656
  %v661 = vadd.f32 %v657, %v658
  %v662 = vadd.f32 %v661, %v659
  %v663 = vadd.f32 %v662, %v660
  %v664 = vrot.slane %v663, 4
  %v665 = vadd.f32 %v663, %v664
  %v666 = vrot.slane %v665, 2
  %v667 = vadd.f32 %v665, %v666
  %v668 = vrot.slane %v667, 1
  %v669 = vadd.f32 %v667, %v668
  %670 = vmatprep.subr.mxu0 0.0
  %671 = vmatpush1.msra.mxu0 %v52
  %672 = vmatprep.subr.mxu0 0.0
  %673 = vmatpush1.msra.mxu0 %v53
  %674 = vmatprep.subr.mxu0 0.0
  %675 = vmatpush1.msra.mxu0 %v54
  %676 = vmatprep.subr.mxu0 0.0
  %677 = vmatpush1.msra.mxu0 %v55
  %678 = vmatprep.subr.mxu0 0.0
  %679 = vmatpush1.msra.mxu0 %v56
  %680 = vmatprep.subr.mxu0 0.0
  %681 = vmatpush1.msra.mxu0 %v57
  %682 = vmatprep.subr.mxu0 0.0
  %683 = vmatpush1.msra.mxu0 %v58
  %684 = vmatprep.subr.mxu0 0.0
  %685 = vmatpush1.msra.mxu0 %v59
  %686 = vmatprep.subr.mxu0 0.0
  %687 = vmatpush1.msra.mxu0 %v60
  %688 = vmatprep.subr.mxu0 0.0
  %689 = vmatpush1.msra.mxu0 %v61
  %690 = vmatprep.subr.mxu0 0.0
  %691 = vmatpush1.msra.mxu0 %v62
  %692 = vmatprep.subr.mxu0 0.0
  %693 = vmatpush1.msra.mxu0 %v63
  %694 = vmatprep.subr.mxu0 0.0
  %695 = vmatpush1.msra.mxu0 %v64
  %696 = vmatprep.subr.mxu0 0.0
  %697 = vmatpush1.msra.mxu0 %v65
  %698 = vmatprep.subr.mxu0 0.0
  %699 = vmatpush1.msra.mxu0 %v66
  %700 = vmatprep.subr.mxu0 0.0
  %701 = vmatpush1.msra.mxu0 %v67
  %702 = vmatprep.subr.mxu0 0.0
  %703 = vmatpush1.msra.mxu0 0.0
  %704 = vmatprep.subr.mxu0 0.0
  %705 = vmatpush1.msra.mxu0 0.0
  %706 = vmatprep.subr.mxu0 0.0
  %707 = vmatpush1.msra.mxu0 0.0
  %708 = vmatprep.subr.mxu0 0.0
  %709 = vmatpush1.msra.mxu0 0.0
  %710 = vmatprep.subr.mxu0 0.0
  %711 = vmatpush1.msra.mxu0 0.0
  %712 = vmatprep.subr.mxu0 0.0
  %713 = vmatpush1.msra.mxu0 0.0
  %714 = vmatprep.subr.mxu0 0.0
  %715 = vmatpush1.msra.mxu0 0.0
  %716 = vmatprep.subr.mxu0 0.0
  %717 = vmatpush1.msra.mxu0 0.0
  %718 = vmatprep.subr.mxu0 0.0
  %719 = vmatpush1.msra.mxu0 0.0
  %720 = vmatprep.subr.mxu0 0.0
  %721 = vmatpush1.msra.mxu0 0.0
  %722 = vmatprep.subr.mxu0 0.0
  %723 = vmatpush1.msra.mxu0 0.0
  %724 = vmatprep.subr.mxu0 0.0
  %725 = vmatpush1.msra.mxu0 0.0
  %726 = vmatprep.subr.mxu0 0.0
  %727 = vmatpush1.msra.mxu0 0.0
  %728 = vmatprep.subr.mxu0 0.0
  %729 = vmatpush1.msra.mxu0 0.0
  %730 = vmatprep.subr.mxu0 0.0
  %731 = vmatpush1.msra.mxu0 0.0
  %732 = vmatprep.subr.mxu0 0.0
  %733 = vmatpush1.msra.mxu0 0.0
  %734 = vmatprep.mubr.f32.mxu0 0.0
  %735 = vmatmul.mubr.f32.gmra.mrb[0].mxu0 %v669
  %v736 = vpop.f32.mrb[0].mxu0
  %v737 = vadd.f32 0.0, %v736
  %v738 = vpop.f32.mrb[0].mxu0
  %739 = vdwg.mxu0
  %v740 = vmul.f32 %v737, 0.001953125
  %v741 = vadd.f32 %v740, 1e-05
  %v742 = vrsqrt.pop %v741
  %v743 = vmul.f32 %v69, %v742
  %v745 = vsel %vm575, %v743, 0
  %747 = vmatprep.subr.mxu0 0.0
  %748 = vmatpush1.msra.mxu0 %v68
  %749 = vmatprep.subr.mxu0 0.0
  %750 = vmatpush1.msra.mxu0 0.0
  %751 = vmatprep.subr.mxu0 0.0
  %752 = vmatpush1.msra.mxu0 0.0
  %753 = vmatprep.subr.mxu0 0.0
  %754 = vmatpush1.msra.mxu0 0.0
  %755 = vmatprep.subr.mxu0 0.0
  %756 = vmatpush1.msra.mxu0 0.0
  %757 = vmatprep.subr.mxu0 0.0
  %758 = vmatpush1.msra.mxu0 0.0
  %759 = vmatprep.subr.mxu0 0.0
  %760 = vmatpush1.msra.mxu0 0.0
  %761 = vmatprep.subr.mxu0 0.0
  %762 = vmatpush1.msra.mxu0 0.0
  %763 = vmatprep.subr.mxu0 0.0
  %764 = vmatpush1.msra.mxu0 0.0
  %765 = vmatprep.subr.mxu0 0.0
  %766 = vmatpush1.msra.mxu0 0.0
  %767 = vmatprep.subr.mxu0 0.0
  %768 = vmatpush1.msra.mxu0 0.0
  %769 = vmatprep.subr.mxu0 0.0
  %770 = vmatpush1.msra.mxu0 0.0
  %771 = vmatprep.subr.mxu0 0.0
  %772 = vmatpush1.msra.mxu0 0.0
  %773 = vmatprep.subr.mxu0 0.0
  %774 = vmatpush1.msra.mxu0 0.0
  %775 = vmatprep.subr.mxu0 0.0
  %776 = vmatpush1.msra.mxu0 0.0
  %777 = vmatprep.subr.mxu0 0.0
  %778 = vmatpush1.msra.mxu0 0.0
  %779 = vmatprep.subr.mxu0 0.0
  %780 = vmatpush1.msra.mxu0 0.0
  %781 = vmatprep.subr.mxu0 0.0
  %782 = vmatpush1.msra.mxu0 0.0
  %783 = vmatprep.subr.mxu0 0.0
  %784 = vmatpush1.msra.mxu0 0.0
  %785 = vmatprep.subr.mxu0 0.0
  %786 = vmatpush1.msra.mxu0 0.0
  %787 = vmatprep.subr.mxu0 0.0
  %788 = vmatpush1.msra.mxu0 0.0
  %789 = vmatprep.subr.mxu0 0.0
  %790 = vmatpush1.msra.mxu0 0.0
  %791 = vmatprep.subr.mxu0 0.0
  %792 = vmatpush1.msra.mxu0 0.0
  %793 = vmatprep.subr.mxu0 0.0
  %794 = vmatpush1.msra.mxu0 0.0
  %795 = vmatprep.subr.mxu0 0.0
  %796 = vmatpush1.msra.mxu0 0.0
  %797 = vmatprep.subr.mxu0 0.0
  %798 = vmatpush1.msra.mxu0 0.0
  %799 = vmatprep.subr.mxu0 0.0
  %800 = vmatpush1.msra.mxu0 0.0
  %801 = vmatprep.subr.mxu0 0.0
  %802 = vmatpush1.msra.mxu0 0.0
  %803 = vmatprep.subr.mxu0 0.0
  %804 = vmatpush1.msra.mxu0 0.0
  %805 = vmatprep.subr.mxu0 0.0
  %806 = vmatpush1.msra.mxu0 0.0
  %807 = vmatprep.subr.mxu0 0.0
  %808 = vmatpush1.msra.mxu0 0.0
  %809 = vmatprep.subr.mxu0 0.0
  %810 = vmatpush1.msra.mxu0 0.0
  %811 = vmatprep.mubr.f32.mxu0 0.0
  %812 = vmatmul.mubr.f32.gmra.mrb[0].mxu0 %v745
  %v813 = vpop.f32.mrb[0].mxu0
  %v814 = vadd.f32 0.0, %v813
  %v815 = vpop.f32.mrb[0].mxu0
  %816 = vdwg.mxu0
  %v817 = vlaneseq
  %v818 = vshrl.u32 %v817, 7
  %v819 = vsub.s32 0, %v818
  %v820 = vrot.slane %v814, %v819
  %v821 = vmul.f32 %v653, %v820
  %v822 = vmul.f32 %v654, %v820
  %v823 = vmul.f32 %v655, %v820
  %v824 = vmul.f32 %v656, %v820
  %v826 = vlaneseq
  %v827 = vshrl.u32 %v826, 7
  %v828 = vsub.s32 0, %v827
  %v829 = vrot.slane %v70, %v828
  %v831 = vadd.f32 %v821, %v829
  %v832 = vadd.f32 %v822, %v829
  %v833 = vadd.f32 %v823, %v829
  %v834 = vadd.f32 %v824, %v829
  %v835 = vmax.f32 %v831, 0.0
  %v836 = vmax.f32 %v832, 0.0
  %v837 = vmax.f32 %v833, 0.0
  %v838 = vmax.f32 %v834, 0.0
  %839 = vmatprep.subr.mxu0 0.0
  %840 = vmatpush1.msra.mxu0 %v835
  %841 = vmatprep.subr.mxu0 0.0
  %842 = vmatpush1.msra.mxu0 %v836
  %843 = vmatprep.subr.mxu0 0.0
  %844 = vmatpush1.msra.mxu0 %v837
  %845 = vmatprep.subr.mxu0 0.0
  %846 = vmatpush1.msra.mxu0 %v838
  %847 = vmatprep.subr.mxu0 0.0
  %848 = vmatpush1.msra.mxu0 0.0
  %849 = vmatprep.subr.mxu0 0.0
  %850 = vmatpush1.msra.mxu0 0.0
  %851 = vmatprep.subr.mxu0 0.0
  %852 = vmatpush1.msra.mxu0 0.0
  %853 = vmatprep.subr.mxu0 0.0
  %854 = vmatpush1.msra.mxu0 0.0
  %855 = vmatprep.subr.mxu0 0.0
  %856 = vmatpush1.msra.mxu0 0.0
  %857 = vmatprep.subr.mxu0 0.0
  %858 = vmatpush1.msra.mxu0 0.0
  %859 = vmatprep.subr.mxu0 0.0
  %860 = vmatpush1.msra.mxu0 0.0
  %861 = vmatprep.subr.mxu0 0.0
  %862 = vmatpush1.msra.mxu0 0.0
  %863 = vmatprep.subr.mxu0 0.0
  %864 = vmatpush1.msra.mxu0 0.0
  %865 = vmatprep.subr.mxu0 0.0
  %866 = vmatpush1.msra.mxu0 0.0
  %867 = vmatprep.subr.mxu0 0.0
  %868 = vmatpush1.msra.mxu0 0.0
  %869 = vmatprep.subr.mxu0 0.0
  %870 = vmatpush1.msra.mxu0 0.0
  %871 = vmatprep.subr.mxu0 0.0
  %872 = vmatpush1.msra.mxu0 0.0
  %873 = vmatprep.subr.mxu0 0.0
  %874 = vmatpush1.msra.mxu0 0.0
  %875 = vmatprep.subr.mxu0 0.0
  %876 = vmatpush1.msra.mxu0 0.0
  %877 = vmatprep.subr.mxu0 0.0
  %878 = vmatpush1.msra.mxu0 0.0
  %879 = vmatprep.subr.mxu0 0.0
  %880 = vmatpush1.msra.mxu0 0.0
  %881 = vmatprep.subr.mxu0 0.0
  %882 = vmatpush1.msra.mxu0 0.0
  %883 = vmatprep.subr.mxu0 0.0
  %884 = vmatpush1.msra.mxu0 0.0
  %885 = vmatprep.subr.mxu0 0.0
  %886 = vmatpush1.msra.mxu0 0.0
  %887 = vmatprep.subr.mxu0 0.0
  %888 = vmatpush1.msra.mxu0 0.0
  %889 = vmatprep.subr.mxu0 0.0
  %890 = vmatpush1.msra.mxu0 0.0
  %891 = vmatprep.subr.mxu0 0.0
  %892 = vmatpush1.msra.mxu0 0.0
  %893 = vmatprep.subr.mxu0 0.0
  %894 = vmatpush1.msra.mxu0 0.0
  %895 = vmatprep.subr.mxu0 0.0
  %896 = vmatpush1.msra.mxu0 0.0
  %897 = vmatprep.subr.mxu0 0.0
  %898 = vmatpush1.msra.mxu0 0.0
  %899 = vmatprep.subr.mxu0 0.0
  %900 = vmatpush1.msra.mxu0 0.0
  %901 = vmatprep.subr.mxu0 0.0
  %902 = vmatpush1.msra.mxu0 0.0
  %903 = vmatprep.mubr.f32.mxu0 0.0
  %904 = vmatmul.mubr.f32.gmra.mrb[0].mxu0 %v77
  %v905 = vpop.f32.mrb[0].mxu0
  %v906 = vadd.f32 0.0, %v905
  %v907 = vpop.f32.mrb[0].mxu0
  %908 = vmatprep.mubr.f32.mxu0 0.0
  %909 = vmatmul.mubr.f32.gmra.mrb[0].mxu0 %v80
  %v910 = vpop.f32.mrb[0].mxu0
  %v911 = vadd.f32 0.0, %v910
  %v912 = vpop.f32.mrb[0].mxu0
  %913 = vmatprep.mubr.f32.mxu0 0.0
  %914 = vmatmul.mubr.f32.gmra.mrb[0].mxu0 %v83
  %v915 = vpop.f32.mrb[0].mxu0
  %v916 = vadd.f32 0.0, %v915
  %v917 = vpop.f32.mrb[0].mxu0
  %918 = vmatprep.mubr.f32.mxu0 0.0
  %919 = vmatmul.mubr.f32.gmra.mrb[0].mxu0 %v86
  %v920 = vpop.f32.mrb[0].mxu0
  %v921 = vadd.f32 0.0, %v920
  %v922 = vpop.f32.mrb[0].mxu0
  %923 = vdwg.mxu0
  %924 = vmatprep.subr.mxu0 0.0
  %925 = vmatpush1.msra.mxu0 %v835
  %926 = vmatprep.subr.mxu0 0.0
  %927 = vmatpush1.msra.mxu0 %v836
  %928 = vmatprep.subr.mxu0 0.0
  %929 = vmatpush1.msra.mxu0 %v837
  %930 = vmatprep.subr.mxu0 0.0
  %931 = vmatpush1.msra.mxu0 %v838
  %932 = vmatprep.subr.mxu0 0.0
  %933 = vmatpush1.msra.mxu0 0.0
  %934 = vmatprep.subr.mxu0 0.0
  %935 = vmatpush1.msra.mxu0 0.0
  %936 = vmatprep.subr.mxu0 0.0
  %937 = vmatpush1.msra.mxu0 0.0
  %938 = vmatprep.subr.mxu0 0.0
  %939 = vmatpush1.msra.mxu0 0.0
  %940 = vmatprep.subr.mxu0 0.0
  %941 = vmatpush1.msra.mxu0 0.0
  %942 = vmatprep.subr.mxu0 0.0
  %943 = vmatpush1.msra.mxu0 0.0
  %944 = vmatprep.subr.mxu0 0.0
  %945 = vmatpush1.msra.mxu0 0.0
  %946 = vmatprep.subr.mxu0 0.0
  %947 = vmatpush1.msra.mxu0 0.0
  %948 = vmatprep.subr.mxu0 0.0
  %949 = vmatpush1.msra.mxu0 0.0
  %950 = vmatprep.subr.mxu0 0.0
  %951 = vmatpush1.msra.mxu0 0.0
  %952 = vmatprep.subr.mxu0 0.0
  %953 = vmatpush1.msra.mxu0 0.0
  %954 = vmatprep.subr.mxu0 0.0
  %955 = vmatpush1.msra.mxu0 0.0
  %956 = vmatprep.subr.mxu0 0.0
  %957 = vmatpush1.msra.mxu0 0.0
  %958 = vmatprep.subr.mxu0 0.0
  %959 = vmatpush1.msra.mxu0 0.0
  %960 = vmatprep.subr.mxu0 0.0
  %961 = vmatpush1.msra.mxu0 0.0
  %962 = vmatprep.subr.mxu0 0.0
  %963 = vmatpush1.msra.mxu0 0.0
  %964 = vmatprep.subr.mxu0 0.0
  %965 = vmatpush1.msra.mxu0 0.0
  %966 = vmatprep.subr.mxu0 0.0
  %967 = vmatpush1.msra.mxu0 0.0
  %968 = vmatprep.subr.mxu0 0.0
  %969 = vmatpush1.msra.mxu0 0.0
  %970 = vmatprep.subr.mxu0 0.0
  %971 = vmatpush1.msra.mxu0 0.0
  %972 = vmatprep.subr.mxu0 0.0
  %973 = vmatpush1.msra.mxu0 0.0
  %974 = vmatprep.subr.mxu0 0.0
  %975 = vmatpush1.msra.mxu0 0.0
  %976 = vmatprep.subr.mxu0 0.0
  %977 = vmatpush1.msra.mxu0 0.0
  %978 = vmatprep.subr.mxu0 0.0
  %979 = vmatpush1.msra.mxu0 0.0
  %980 = vmatprep.subr.mxu0 0.0
  %981 = vmatpush1.msra.mxu0 0.0
  %982 = vmatprep.subr.mxu0 0.0
  %983 = vmatpush1.msra.mxu0 0.0
  %984 = vmatprep.subr.mxu0 0.0
  %985 = vmatpush1.msra.mxu0 0.0
  %986 = vmatprep.subr.mxu0 0.0
  %987 = vmatpush1.msra.mxu0 0.0
  %988 = vmatprep.mubr.f32.mxu0 0.0
  %989 = vmatmul.mubr.f32.gmra.mrb[0].mxu0 %v174
  %v990 = vpop.f32.mrb[0].mxu0
  %v991 = vadd.f32 0.0, %v990
  %v992 = vpop.f32.mrb[0].mxu0
  %993 = vmatprep.mubr.f32.mxu0 0.0
  %994 = vmatmul.mubr.f32.gmra.mrb[0].mxu0 %v177
  %v995 = vpop.f32.mrb[0].mxu0
  %v996 = vadd.f32 0.0, %v995
  %v997 = vpop.f32.mrb[0].mxu0
  %998 = vmatprep.mubr.f32.mxu0 0.0
  %999 = vmatmul.mubr.f32.gmra.mrb[0].mxu0 %v180
  %v1000 = vpop.f32.mrb[0].mxu0
  %v1001 = vadd.f32 0.0, %v1000
  %v1002 = vpop.f32.mrb[0].mxu0
  %1003 = vmatprep.mubr.f32.mxu0 0.0
  %1004 = vmatmul.mubr.f32.gmra.mrb[0].mxu0 %v183
  %v1005 = vpop.f32.mrb[0].mxu0
  %v1006 = vadd.f32 0.0, %v1005
  %v1007 = vpop.f32.mrb[0].mxu0
  %1008 = vdwg.mxu0
  %v1009 = vld [vmem:[%s5] sm:$0xff]
  %v1010 = vld [vmem:[%s5 + $0x8] sm:$0xff]
  %v1011 = vld [vmem:[%s5 + $0x10] sm:$0xff]
  %v1012 = vld [vmem:[%s5 + $0x18] sm:$0xff]
  %v1013 = vld [vmem:[%s5 + $0x20] sm:$0xff]
  %v1014 = vld [vmem:[%s5 + $0x28] sm:$0xff]
  %v1015 = vld [vmem:[%s5 + $0x30] sm:$0xff]
  %v1016 = vld [vmem:[%s5 + $0x38] sm:$0xff]
  %v1017 = vld [vmem:[%s5 + $0x40] sm:$0xff]
  %v1018 = vld [vmem:[%s5 + $0x48] sm:$0xff]
  %v1019 = vld [vmem:[%s5 + $0x50] sm:$0xff]
  %v1020 = vld [vmem:[%s5 + $0x58] sm:$0xff]
  %v1021 = vld [vmem:[%s5 + $0x60] sm:$0xff]
  %v1022 = vld [vmem:[%s5 + $0x68] sm:$0xff]
  %v1023 = vld [vmem:[%s5 + $0x70] sm:$0xff]
  %v1024 = vld [vmem:[%s5 + $0x78] sm:$0xff]
  %v1025 = vld [vmem:[%s5 + $0x80] sm:$0xff]
  %v1026 = vld [vmem:[%s5 + $0x88] sm:$0xff]
  %v1027 = vld [vmem:[%s5 + $0x90] sm:$0xff]
  %v1028 = vld [vmem:[%s5 + $0x98] sm:$0xff]
  %v1029 = vld [vmem:[%s5 + $0xa0] sm:$0xff]
  %v1030 = vld [vmem:[%s5 + $0xa8] sm:$0xff]
  %v1031 = vld [vmem:[%s5 + $0xb0] sm:$0xff]
  %v1032 = vld [vmem:[%s5 + $0xb8] sm:$0xff]
  %v1033 = vld [vmem:[%s5 + $0xc0] sm:$0xff]
  %v1034 = vld [vmem:[%s5 + $0xc8] sm:$0xff]
  %v1035 = vld [vmem:[%s5 + $0xd0] sm:$0xff]
  %v1036 = vld [vmem:[%s5 + $0xd8] sm:$0xff]
  %v1037 = vld [vmem:[%s5 + $0xe0] sm:$0xff]
  %v1038 = vld [vmem:[%s5 + $0xe8] sm:$0xff]
  %v1039 = vld [vmem:[%s5 + $0xf0] sm:$0xff]
  %v1040 = vld [vmem:[%s5 + $0xf8] sm:$0xff]
  %v1041 = vld [vmem:[%s5 + $0x100] sm:$0xff]
  %v1042 = vld [vmem:[%s5 + $0x108] sm:$0xff]
  %v1043 = vld [vmem:[%s5 + $0x110] sm:$0xff]
  %v1044 = vld [vmem:[%s5 + $0x118] sm:$0xff]
  %v1045 = vld [vmem:[%s5 + $0x120] sm:$0xff]
  %v1046 = vld [vmem:[%s5 + $0x128] sm:$0xff]
  %v1047 = vld [vmem:[%s5 + $0x130] sm:$0xff]
  %v1048 = vld [vmem:[%s5 + $0x138] sm:$0xff]
  %v1049 = vld [vmem:[%s5 + $0x140] sm:$0xff]
  %v1050 = vld [vmem:[%s5 + $0x148] sm:$0xff]
  %v1051 = vld [vmem:[%s5 + $0x150] sm:$0xff]
  %v1052 = vld [vmem:[%s5 + $0x158] sm:$0xff]
  %v1053 = vld [vmem:[%s5 + $0x160] sm:$0xff]
  %v1054 = vld [vmem:[%s5 + $0x168] sm:$0xff]
  %v1055 = vld [vmem:[%s5 + $0x170] sm:$0xff]
  %v1056 = vld [vmem:[%s5 + $0x178] sm:$0xff]
  %v1057 = vld [vmem:[%s6] sm:$0x1]
  %v1059 = vlaneseq
  %v1060 = vshrl.u32 %v1059, 7
  %v1061 = vsub.s32 0, %v1060
  %v1062 = vrot.slane %v1057, %v1061
  %1064 = vmatprep.subr.mxu0 0.0
  %1065 = vmatpush1.msra.mxu0 %v1009
  %1066 = vmatprep.subr.mxu0 0.0
  %1067 = vmatpush1.msra.mxu0 %v1010
  %1068 = vmatprep.subr.mxu0 0.0
  %1069 = vmatpush1.msra.mxu0 %v1011
  %1070 = vmatprep.subr.mxu0 0.0
  %1071 = vmatpush1.msra.mxu0 %v1012
  %1072 = vmatprep.subr.mxu0 0.0
  %1073 = vmatpush1.msra.mxu0 %v1013
  %1074 = vmatprep.subr.mxu0 0.0
  %1075 = vmatpush1.msra.mxu0 %v1014
  %1076 = vmatprep.subr.mxu0 0.0
  %1077 = vmatpush1.msra.mxu0 %v1015
  %1078 = vmatprep.subr.mxu0 0.0
  %1079 = vmatpush1.msra.mxu0 %v1016
  %1080 = vmatprep.subr.mxu0 0.0
  %1081 = vmatpush1.msra.mxu0 %v1017
  %1082 = vmatprep.subr.mxu0 0.0
  %1083 = vmatpush1.msra.mxu0 %v1018
  %1084 = vmatprep.subr.mxu0 0.0
  %1085 = vmatpush1.msra.mxu0 %v1019
  %1086 = vmatprep.subr.mxu0 0.0
  %1087 = vmatpush1.msra.mxu0 %v1020
  %1088 = vmatprep.subr.mxu0 0.0
  %1089 = vmatpush1.msra.mxu0 %v1021
  %1090 = vmatprep.subr.mxu0 0.0
  %1091 = vmatpush1.msra.mxu0 %v1022
  %1092 = vmatprep.subr.mxu0 0.0
  %1093 = vmatpush1.msra.mxu0 %v1023
  %1094 = vmatprep.subr.mxu0 0.0
  %1095 = vmatpush1.msra.mxu0 %v1024
  %1096 = vmatprep.subr.mxu0 0.0
  %1097 = vmatpush1.msra.mxu0 %v1025
  %1098 = vmatprep.subr.mxu0 0.0
  %1099 = vmatpush1.msra.mxu0 %v1026
  %1100 = vmatprep.subr.mxu0 0.0
  %1101 = vmatpush1.msra.mxu0 %v1027
  %1102 = vmatprep.subr.mxu0 0.0
  %1103 = vmatpush1.msra.mxu0 %v1028
  %1104 = vmatprep.subr.mxu0 0.0
  %1105 = vmatpush1.msra.mxu0 %v1029
  %1106 = vmatprep.subr.mxu0 0.0
  %1107 = vmatpush1.msra.mxu0 %v1030
  %1108 = vmatprep.subr.mxu0 0.0
  %1109 = vmatpush1.msra.mxu0 %v1031
  %1110 = vmatprep.subr.mxu0 0.0
  %1111 = vmatpush1.msra.mxu0 %v1032
  %1112 = vmatprep.subr.mxu0 0.0
  %1113 = vmatpush1.msra.mxu0 %v1033
  %1114 = vmatprep.subr.mxu0 0.0
  %1115 = vmatpush1.msra.mxu0 %v1034
  %1116 = vmatprep.subr.mxu0 0.0
  %1117 = vmatpush1.msra.mxu0 %v1035
  %1118 = vmatprep.subr.mxu0 0.0
  %1119 = vmatpush1.msra.mxu0 %v1036
  %1120 = vmatprep.subr.mxu0 0.0
  %1121 = vmatpush1.msra.mxu0 %v1037
  %1122 = vmatprep.subr.mxu0 0.0
  %1123 = vmatpush1.msra.mxu0 %v1038
  %1124 = vmatprep.subr.mxu0 0.0
  %1125 = vmatpush1.msra.mxu0 %v1039
  %1126 = vmatprep.subr.mxu0 0.0
  %1127 = vmatpush1.msra.mxu0 %v1040
  %1128 = vmatprep.mubr.f32.mxu0 %v835
  %1129 = vmatmul.mubr.f32.gmra.mrb[0].mxu0 %v906
  %v1130 = vpop.f32.mrb[0].mxu0
  %v1131 = vadd.f32 %v1062, %v1130
  %v1132 = vpop.f32.mrb[0].mxu0
  %1133 = vmatprep.mubr.f32.mxu0 %v836
  %1134 = vmatmul.mubr.f32.gmra.mrb[0].mxu0 %v911
  %v1135 = vpop.f32.mrb[0].mxu0
  %v1136 = vadd.f32 %v1062, %v1135
  %v1137 = vpop.f32.mrb[0].mxu0
  %1138 = vmatprep.mubr.f32.mxu0 %v837
  %1139 = vmatmul.mubr.f32.gmra.mrb[0].mxu0 %v916
  %v1140 = vpop.f32.mrb[0].mxu0
  %v1141 = vadd.f32 %v1062, %v1140
  %v1142 = vpop.f32.mrb[0].mxu0
  %1143 = vmatprep.mubr.f32.mxu0 %v838
  %1144 = vmatmul.mubr.f32.gmra.mrb[0].mxu0 %v921
  %v1145 = vpop.f32.mrb[0].mxu0
  %v1146 = vadd.f32 %v1062, %v1145
  %v1147 = vpop.f32.mrb[0].mxu0
  %1148 = vdwg.mxu0
  %1149 = vmatprep.subr.mxu0 0.0
  %1150 = vmatpush1.msra.mxu0 %v1041
  %1151 = vmatprep.subr.mxu0 0.0
  %1152 = vmatpush1.msra.mxu0 %v1042
  %1153 = vmatprep.subr.mxu0 0.0
  %1154 = vmatpush1.msra.mxu0 %v1043
  %1155 = vmatprep.subr.mxu0 0.0
  %1156 = vmatpush1.msra.mxu0 %v1044
  %1157 = vmatprep.subr.mxu0 0.0
  %1158 = vmatpush1.msra.mxu0 %v1045
  %1159 = vmatprep.subr.mxu0 0.0
  %1160 = vmatpush1.msra.mxu0 %v1046
  %1161 = vmatprep.subr.mxu0 0.0
  %1162 = vmatpush1.msra.mxu0 %v1047
  %1163 = vmatprep.subr.mxu0 0.0
  %1164 = vmatpush1.msra.mxu0 %v1048
  %1165 = vmatprep.subr.mxu0 0.0
  %1166 = vmatpush1.msra.mxu0 %v1049
  %1167 = vmatprep.subr.mxu0 0.0
  %1168 = vmatpush1.msra.mxu0 %v1050
  %1169 = vmatprep.subr.mxu0 0.0
  %1170 = vmatpush1.msra.mxu0 %v1051
  %1171 = vmatprep.subr.mxu0 0.0
  %1172 = vmatpush1.msra.mxu0 %v1052
  %1173 = vmatprep.subr.mxu0 0.0
  %1174 = vmatpush1.msra.mxu0 %v1053
  %1175 = vmatprep.subr.mxu0 0.0
  %1176 = vmatpush1.msra.mxu0 %v1054
  %1177 = vmatprep.subr.mxu0 0.0
  %1178 = vmatpush1.msra.mxu0 %v1055
  %1179 = vmatprep.subr.mxu0 0.0
  %1180 = vmatpush1.msra.mxu0 %v1056
  %1181 = vmatprep.subr.mxu0 0.0
  %1182 = vmatpush1.msra.mxu0 0.0
  %1183 = vmatprep.subr.mxu0 0.0
  %1184 = vmatpush1.msra.mxu0 0.0
  %1185 = vmatprep.subr.mxu0 0.0
  %1186 = vmatpush1.msra.mxu0 0.0
  %1187 = vmatprep.subr.mxu0 0.0
  %1188 = vmatpush1.msra.mxu0 0.0
  %1189 = vmatprep.subr.mxu0 0.0
  %1190 = vmatpush1.msra.mxu0 0.0
  %1191 = vmatprep.subr.mxu0 0.0
  %1192 = vmatpush1.msra.mxu0 0.0
  %1193 = vmatprep.subr.mxu0 0.0
  %1194 = vmatpush1.msra.mxu0 0.0
  %1195 = vmatprep.subr.mxu0 0.0
  %1196 = vmatpush1.msra.mxu0 0.0
  %1197 = vmatprep.subr.mxu0 0.0
  %1198 = vmatpush1.msra.mxu0 0.0
  %1199 = vmatprep.subr.mxu0 0.0
  %1200 = vmatpush1.msra.mxu0 0.0
  %1201 = vmatprep.subr.mxu0 0.0
  %1202 = vmatpush1.msra.mxu0 0.0
  %1203 = vmatprep.subr.mxu0 0.0
  %1204 = vmatpush1.msra.mxu0 0.0
  %1205 = vmatprep.subr.mxu0 0.0
  %1206 = vmatpush1.msra.mxu0 0.0
  %1207 = vmatprep.subr.mxu0 0.0
  %1208 = vmatpush1.msra.mxu0 0.0
  %1209 = vmatprep.subr.mxu0 0.0
  %1210 = vmatpush1.msra.mxu0 0.0
  %1211 = vmatprep.subr.mxu0 0.0
  %1212 = vmatpush1.msra.mxu0 0.0
  %1213 = vmatprep.mubr.f32.mxu0 0.0
  %1214 = vmatmul.mubr.f32.gmra.mrb[0].mxu0 %v991
  %v1215 = vpop.f32.mrb[0].mxu0
  %v1216 = vadd.f32 %v1131, %v1215
  %v1217 = vpop.f32.mrb[0].mxu0
  %1218 = vmatprep.mubr.f32.mxu0 0.0
  %1219 = vmatmul.mubr.f32.gmra.mrb[0].mxu0 %v996
  %v1220 = vpop.f32.mrb[0].mxu0
  %v1221 = vadd.f32 %v1136, %v1220
  %v1222 = vpop.f32.mrb[0].mxu0
  %1223 = vmatprep.mubr.f32.mxu0 0.0
  %1224 = vmatmul.mubr.f32.gmra.mrb[0].mxu0 %v1001
  %v1225 = vpop.f32.mrb[0].mxu0
  %v1226 = vadd.f32 %v1141, %v1225
  %v1227 = vpop.f32.mrb[0].mxu0
  %1228 = vmatprep.mubr.f32.mxu0 0.0
  %1229 = vmatmul.mubr.f32.gmra.mrb[0].mxu0 %v1006
  %v1230 = vpop.f32.mrb[0].mxu0
  %v1231 = vadd.f32 %v1146, %v1230
  %v1232 = vpop.f32.mrb[0].mxu0
  %1233 = vdwg.mxu0
  %v1234 = vadd.f32 %v1216, %v1221
  %v1235 = vadd.f32 %v1234, %v1226
  %v1236 = vadd.f32 %v1235, %v1231
  %v1237 = vrot.slane %v1236, 4
  %v1238 = vadd.f32 %v1236, %v1237
  %v1239 = vrot.slane %v1238, 2
  %v1240 = vadd.f32 %v1238, %v1239
  %v1241 = vrot.slane %v1240, 1
  %v1242 = vadd.f32 %v1240, %v1241
  %1243 = vmatprep.subr.mxu0 0.0
  %1244 = vmatpush1.msra.mxu0 %v52
  %1245 = vmatprep.subr.mxu0 0.0
  %1246 = vmatpush1.msra.mxu0 %v53
  %1247 = vmatprep.subr.mxu0 0.0
  %1248 = vmatpush1.msra.mxu0 %v54
  %1249 = vmatprep.subr.mxu0 0.0
  %1250 = vmatpush1.msra.mxu0 %v55
  %1251 = vmatprep.subr.mxu0 0.0
  %1252 = vmatpush1.msra.mxu0 %v56
  %1253 = vmatprep.subr.mxu0 0.0
  %1254 = vmatpush1.msra.mxu0 %v57
  %1255 = vmatprep.subr.mxu0 0.0
  %1256 = vmatpush1.msra.mxu0 %v58
  %1257 = vmatprep.subr.mxu0 0.0
  %1258 = vmatpush1.msra.mxu0 %v59
  %1259 = vmatprep.subr.mxu0 0.0
  %1260 = vmatpush1.msra.mxu0 %v60
  %1261 = vmatprep.subr.mxu0 0.0
  %1262 = vmatpush1.msra.mxu0 %v61
  %1263 = vmatprep.subr.mxu0 0.0
  %1264 = vmatpush1.msra.mxu0 %v62
  %1265 = vmatprep.subr.mxu0 0.0
  %1266 = vmatpush1.msra.mxu0 %v63
  %1267 = vmatprep.subr.mxu0 0.0
  %1268 = vmatpush1.msra.mxu0 %v64
  %1269 = vmatprep.subr.mxu0 0.0
  %1270 = vmatpush1.msra.mxu0 %v65
  %1271 = vmatprep.subr.mxu0 0.0
  %1272 = vmatpush1.msra.mxu0 %v66
  %1273 = vmatprep.subr.mxu0 0.0
  %1274 = vmatpush1.msra.mxu0 %v67
  %1275 = vmatprep.subr.mxu0 0.0
  %1276 = vmatpush1.msra.mxu0 0.0
  %1277 = vmatprep.subr.mxu0 0.0
  %1278 = vmatpush1.msra.mxu0 0.0
  %1279 = vmatprep.subr.mxu0 0.0
  %1280 = vmatpush1.msra.mxu0 0.0
  %1281 = vmatprep.subr.mxu0 0.0
  %1282 = vmatpush1.msra.mxu0 0.0
  %1283 = vmatprep.subr.mxu0 0.0
  %1284 = vmatpush1.msra.mxu0 0.0
  %1285 = vmatprep.subr.mxu0 0.0
  %1286 = vmatpush1.msra.mxu0 0.0
  %1287 = vmatprep.subr.mxu0 0.0
  %1288 = vmatpush1.msra.mxu0 0.0
  %1289 = vmatprep.subr.mxu0 0.0
  %1290 = vmatpush1.msra.mxu0 0.0
  %1291 = vmatprep.subr.mxu0 0.0
  %1292 = vmatpush1.msra.mxu0 0.0
  %1293 = vmatprep.subr.mxu0 0.0
  %1294 = vmatpush1.msra.mxu0 0.0
  %1295 = vmatprep.subr.mxu0 0.0
  %1296 = vmatpush1.msra.mxu0 0.0
  %1297 = vmatprep.subr.mxu0 0.0
  %1298 = vmatpush1.msra.mxu0 0.0
  %1299 = vmatprep.subr.mxu0 0.0
  %1300 = vmatpush1.msra.mxu0 0.0
  %1301 = vmatprep.subr.mxu0 0.0
  %1302 = vmatpush1.msra.mxu0 0.0
  %1303 = vmatprep.subr.mxu0 0.0
  %1304 = vmatpush1.msra.mxu0 0.0
  %1305 = vmatprep.subr.mxu0 0.0
  %1306 = vmatpush1.msra.mxu0 0.0
  %1307 = vmatprep.mubr.f32.mxu0 0.0
  %1308 = vmatmul.mubr.f32.gmra.mrb[0].mxu0 %v1242
  %v1309 = vpop.f32.mrb[0].mxu0
  %v1310 = vadd.f32 0.0, %v1309
  %v1311 = vpop.f32.mrb[0].mxu0
  %1312 = vdwg.mxu0
  %v1313 = vmul.f32 %v1310, 0.001953125
  %v1315 = vsel %vm575, %v1313, 0
  %1317 = vmatprep.subr.mxu0 0.0
  %1318 = vmatpush1.msra.mxu0 %v68
  %1319 = vmatprep.subr.mxu0 0.0
  %1320 = vmatpush1.msra.mxu0 0.0
  %1321 = vmatprep.subr.mxu0 0.0
  %1322 = vmatpush1.msra.mxu0 0.0
  %1323 = vmatprep.subr.mxu0 0.0
  %1324 = vmatpush1.msra.mxu0 0.0
  %1325 = vmatprep.subr.mxu0 0.0
  %1326 = vmatpush1.msra.mxu0 0.0
  %1327 = vmatprep.subr.mxu0 0.0
  %1328 = vmatpush1.msra.mxu0 0.0
  %1329 = vmatprep.subr.mxu0 0.0
  %1330 = vmatpush1.msra.mxu0 0.0
  %1331 = vmatprep.subr.mxu0 0.0
  %1332 = vmatpush1.msra.mxu0 0.0
  %1333 = vmatprep.subr.mxu0 0.0
  %1334 = vmatpush1.msra.mxu0 0.0
  %1335 = vmatprep.subr.mxu0 0.0
  %1336 = vmatpush1.msra.mxu0 0.0
  %1337 = vmatprep.subr.mxu0 0.0
  %1338 = vmatpush1.msra.mxu0 0.0
  %1339 = vmatprep.subr.mxu0 0.0
  %1340 = vmatpush1.msra.mxu0 0.0
  %1341 = vmatprep.subr.mxu0 0.0
  %1342 = vmatpush1.msra.mxu0 0.0
  %1343 = vmatprep.subr.mxu0 0.0
  %1344 = vmatpush1.msra.mxu0 0.0
  %1345 = vmatprep.subr.mxu0 0.0
  %1346 = vmatpush1.msra.mxu0 0.0
  %1347 = vmatprep.subr.mxu0 0.0
  %1348 = vmatpush1.msra.mxu0 0.0
  %1349 = vmatprep.subr.mxu0 0.0
  %1350 = vmatpush1.msra.mxu0 0.0
  %1351 = vmatprep.subr.mxu0 0.0
  %1352 = vmatpush1.msra.mxu0 0.0
  %1353 = vmatprep.subr.mxu0 0.0
  %1354 = vmatpush1.msra.mxu0 0.0
  %1355 = vmatprep.subr.mxu0 0.0
  %1356 = vmatpush1.msra.mxu0 0.0
  %1357 = vmatprep.subr.mxu0 0.0
  %1358 = vmatpush1.msra.mxu0 0.0
  %1359 = vmatprep.subr.mxu0 0.0
  %1360 = vmatpush1.msra.mxu0 0.0
  %1361 = vmatprep.subr.mxu0 0.0
  %1362 = vmatpush1.msra.mxu0 0.0
  %1363 = vmatprep.subr.mxu0 0.0
  %1364 = vmatpush1.msra.mxu0 0.0
  %1365 = vmatprep.subr.mxu0 0.0
  %1366 = vmatpush1.msra.mxu0 0.0
  %1367 = vmatprep.subr.mxu0 0.0
  %1368 = vmatpush1.msra.mxu0 0.0
  %1369 = vmatprep.subr.mxu0 0.0
  %1370 = vmatpush1.msra.mxu0 0.0
  %1371 = vmatprep.subr.mxu0 0.0
  %1372 = vmatpush1.msra.mxu0 0.0
  %1373 = vmatprep.subr.mxu0 0.0
  %1374 = vmatpush1.msra.mxu0 0.0
  %1375 = vmatprep.subr.mxu0 0.0
  %1376 = vmatpush1.msra.mxu0 0.0
  %1377 = vmatprep.subr.mxu0 0.0
  %1378 = vmatpush1.msra.mxu0 0.0
  %1379 = vmatprep.subr.mxu0 0.0
  %1380 = vmatpush1.msra.mxu0 0.0
  %1381 = vmatprep.mubr.f32.mxu0 0.0
  %1382 = vmatmul.mubr.f32.gmra.mrb[0].mxu0 %v1315
  %v1383 = vpop.f32.mrb[0].mxu0
  %v1384 = vadd.f32 0.0, %v1383
  %v1385 = vpop.f32.mrb[0].mxu0
  %1386 = vdwg.mxu0
  %v1387 = vlaneseq
  %v1388 = vshrl.u32 %v1387, 7
  %v1389 = vsub.s32 0, %v1388
  %v1390 = vrot.slane %v1384, %v1389
  %v1391 = vsub.f32 %v1216, %v1390
  %v1392 = vsub.f32 %v1221, %v1390
  %v1393 = vsub.f32 %v1226, %v1390
  %v1394 = vsub.f32 %v1231, %v1390
  %v1395 = vmul.f32 %v1391, %v1391
  %v1396 = vmul.f32 %v1392, %v1392
  %v1397 = vmul.f32 %v1393, %v1393
  %v1398 = vmul.f32 %v1394, %v1394
  %v1399 = vadd.f32 %v1395, %v1396
  %v1400 = vadd.f32 %v1399, %v1397
  %v1401 = vadd.f32 %v1400, %v1398
  %v1402 = vrot.slane %v1401, 4
  %v1403 = vadd.f32 %v1401, %v1402
  %v1404 = vrot.slane %v1403, 2
  %v1405 = vadd.f32 %v1403, %v1404
  %v1406 = vrot.slane %v1405, 1
  %v1407 = vadd.f32 %v1405, %v1406
  %1408 = vmatprep.subr.mxu0 0.0
  %1409 = vmatpush1.msra.mxu0 %v52
  %1410 = vmatprep.subr.mxu0 0.0
  %1411 = vmatpush1.msra.mxu0 %v53
  %1412 = vmatprep.subr.mxu0 0.0
  %1413 = vmatpush1.msra.mxu0 %v54
  %1414 = vmatprep.subr.mxu0 0.0
  %1415 = vmatpush1.msra.mxu0 %v55
  %1416 = vmatprep.subr.mxu0 0.0
  %1417 = vmatpush1.msra.mxu0 %v56
  %1418 = vmatprep.subr.mxu0 0.0
  %1419 = vmatpush1.msra.mxu0 %v57
  %1420 = vmatprep.subr.mxu0 0.0
  %1421 = vmatpush1.msra.mxu0 %v58
  %1422 = vmatprep.subr.mxu0 0.0
  %1423 = vmatpush1.msra.mxu0 %v59
  %1424 = vmatprep.subr.mxu0 0.0
  %1425 = vmatpush1.msra.mxu0 %v60
  %1426 = vmatprep.subr.mxu0 0.0
  %1427 = vmatpush1.msra.mxu0 %v61
  %1428 = vmatprep.subr.mxu0 0.0
  %1429 = vmatpush1.msra.mxu0 %v62
  %1430 = vmatprep.subr.mxu0 0.0
  %1431 = vmatpush1.msra.mxu0 %v63
  %1432 = vmatprep.subr.mxu0 0.0
  %1433 = vmatpush1.msra.mxu0 %v64
  %1434 = vmatprep.subr.mxu0 0.0
  %1435 = vmatpush1.msra.mxu0 %v65
  %1436 = vmatprep.subr.mxu0 0.0
  %1437 = vmatpush1.msra.mxu0 %v66
  %1438 = vmatprep.subr.mxu0 0.0
  %1439 = vmatpush1.msra.mxu0 %v67
  %1440 = vmatprep.subr.mxu0 0.0
  %1441 = vmatpush1.msra.mxu0 0.0
  %1442 = vmatprep.subr.mxu0 0.0
  %1443 = vmatpush1.msra.mxu0 0.0
  %1444 = vmatprep.subr.mxu0 0.0
  %1445 = vmatpush1.msra.mxu0 0.0
  %1446 = vmatprep.subr.mxu0 0.0
  %1447 = vmatpush1.msra.mxu0 0.0
  %1448 = vmatprep.subr.mxu0 0.0
  %1449 = vmatpush1.msra.mxu0 0.0
  %1450 = vmatprep.subr.mxu0 0.0
  %1451 = vmatpush1.msra.mxu0 0.0
  %1452 = vmatprep.subr.mxu0 0.0
  %1453 = vmatpush1.msra.mxu0 0.0
  %1454 = vmatprep.subr.mxu0 0.0
  %1455 = vmatpush1.msra.mxu0 0.0
  %1456 = vmatprep.subr.mxu0 0.0
  %1457 = vmatpush1.msra.mxu0 0.0
  %1458 = vmatprep.subr.mxu0 0.0
  %1459 = vmatpush1.msra.mxu0 0.0
  %1460 = vmatprep.subr.mxu0 0.0
  %1461 = vmatpush1.msra.mxu0 0.0
  %1462 = vmatprep.subr.mxu0 0.0
  %1463 = vmatpush1.msra.mxu0 0.0
  %1464 = vmatprep.subr.mxu0 0.0
  %1465 = vmatpush1.msra.mxu0 0.0
  %1466 = vmatprep.subr.mxu0 0.0
  %1467 = vmatpush1.msra.mxu0 0.0
  %1468 = vmatprep.subr.mxu0 0.0
  %1469 = vmatpush1.msra.mxu0 0.0
  %1470 = vmatprep.subr.mxu0 0.0
  %1471 = vmatpush1.msra.mxu0 0.0
  %1472 = vmatprep.mubr.f32.mxu0 0.0
  %1473 = vmatmul.mubr.f32.gmra.mrb[0].mxu0 %v1407
  %v1474 = vpop.f32.mrb[0].mxu0
  %v1475 = vadd.f32 0.0, %v1474
  %v1476 = vpop.f32.mrb[0].mxu0
  %1477 = vdwg.mxu0
  %v1478 = vmul.f32 %v1475, 0.001953125
  %v1479 = vadd.f32 %v1478, 1e-05
  %v1480 = vrsqrt.pop %v1479
  %v1481 = vmul.f32 %v69, %v1480
  %v1483 = vsel %vm575, %v1481, 0
  %1485 = vmatprep.subr.mxu0 0.0
  %1486 = vmatpush1.msra.mxu0 %v68
  %1487 = vmatprep.subr.mxu0 0.0
  %1488 = vmatpush1.msra.mxu0 0.0
  %1489 = vmatprep.subr.mxu0 0.0
  %1490 = vmatpush1.msra.mxu0 0.0
  %1491 = vmatprep.subr.mxu0 0.0
  %1492 = vmatpush1.msra.mxu0 0.0
  %1493 = vmatprep.subr.mxu0 0.0
  %1494 = vmatpush1.msra.mxu0 0.0
  %1495 = vmatprep.subr.mxu0 0.0
  %1496 = vmatpush1.msra.mxu0 0.0
  %1497 = vmatprep.subr.mxu0 0.0
  %1498 = vmatpush1.msra.mxu0 0.0
  %1499 = vmatprep.subr.mxu0 0.0
  %1500 = vmatpush1.msra.mxu0 0.0
  %1501 = vmatprep.subr.mxu0 0.0
  %1502 = vmatpush1.msra.mxu0 0.0
  %1503 = vmatprep.subr.mxu0 0.0
  %1504 = vmatpush1.msra.mxu0 0.0
  %1505 = vmatprep.subr.mxu0 0.0
  %1506 = vmatpush1.msra.mxu0 0.0
  %1507 = vmatprep.subr.mxu0 0.0
  %1508 = vmatpush1.msra.mxu0 0.0
  %1509 = vmatprep.subr.mxu0 0.0
  %1510 = vmatpush1.msra.mxu0 0.0
  %1511 = vmatprep.subr.mxu0 0.0
  %1512 = vmatpush1.msra.mxu0 0.0
  %1513 = vmatprep.subr.mxu0 0.0
  %1514 = vmatpush1.msra.mxu0 0.0
  %1515 = vmatprep.subr.mxu0 0.0
  %1516 = vmatpush1.msra.mxu0 0.0
  %1517 = vmatprep.subr.mxu0 0.0
  %1518 = vmatpush1.msra.mxu0 0.0
  %1519 = vmatprep.subr.mxu0 0.0
  %1520 = vmatpush1.msra.mxu0 0.0
  %1521 = vmatprep.subr.mxu0 0.0
  %1522 = vmatpush1.msra.mxu0 0.0
  %1523 = vmatprep.subr.mxu0 0.0
  %1524 = vmatpush1.msra.mxu0 0.0
  %1525 = vmatprep.subr.mxu0 0.0
  %1526 = vmatpush1.msra.mxu0 0.0
  %1527 = vmatprep.subr.mxu0 0.0
  %1528 = vmatpush1.msra.mxu0 0.0
  %1529 = vmatprep.subr.mxu0 0.0
  %1530 = vmatpush1.msra.mxu0 0.0
  %1531 = vmatprep.subr.mxu0 0.0
  %1532 = vmatpush1.msra.mxu0 0.0
  %1533 = vmatprep.subr.mxu0 0.0
  %1534 = vmatpush1.msra.mxu0 0.0
  %1535 = vmatprep.subr.mxu0 0.0
  %1536 = vmatpush1.msra.mxu0 0.0
  %1537 = vmatprep.subr.mxu0 0.0
  %1538 = vmatpush1.msra.mxu0 0.0
  %1539 = vmatprep.subr.mxu0 0.0
  %1540 = vmatpush1.msra.mxu0 0.0
  %1541 = vmatprep.subr.mxu0 0.0
  %1542 = vmatpush1.msra.mxu0 0.0
  %1543 = vmatprep.subr.mxu0 0.0
  %1544 = vmatpush1.msra.mxu0 0.0
  %1545 = vmatprep.subr.mxu0 0.0
  %1546 = vmatpush1.msra.mxu0 0.0
  %1547 = vmatprep.subr.mxu0 0.0
  %1548 = vmatpush1.msra.mxu0 0.0
  %1549 = vmatprep.mubr.f32.mxu0 0.0
  %1550 = vmatmul.mubr.f32.gmra.mrb[0].mxu0 %v1483
  %v1551 = vpop.f32.mrb[0].mxu0
  %v1552 = vadd.f32 0.0, %v1551
  %v1553 = vpop.f32.mrb[0].mxu0
  %1554 = vdwg.mxu0
  %v1555 = vlaneseq
  %v1556 = vshrl.u32 %v1555, 7
  %v1557 = vsub.s32 0, %v1556
  %v1558 = vrot.slane %v1552, %v1557
  %v1559 = vmul.f32 %v1391, %v1558
  %v1560 = vmul.f32 %v1392, %v1558
  %v1561 = vmul.f32 %v1393, %v1558
  %v1562 = vmul.f32 %v1394, %v1558
  %v1563 = vadd.f32 %v1559, %v829
  %v1564 = vadd.f32 %v1560, %v829
  %v1565 = vadd.f32 %v1561, %v829
  %v1566 = vadd.f32 %v1562, %v829
  %v1567 = vld [vmem:[%s7] sm:$0xff]
  %v1568 = vld [vmem:[%s7 + $0x8] sm:$0xff]
  %v1569 = vld [vmem:[%s7 + $0x10] sm:$0xff]
  %v1570 = vld [vmem:[%s7 + $0x18] sm:$0xff]
  %v1571 = vld [vmem:[%s7 + $0x20] sm:$0xff]
  %v1572 = vld [vmem:[%s7 + $0x28] sm:$0xff]
  %v1573 = vld [vmem:[%s7 + $0x30] sm:$0xff]
  %v1574 = vld [vmem:[%s7 + $0x38] sm:$0xff]
  %v1575 = vld [vmem:[%s7 + $0x40] sm:$0xff]
  %v1576 = vld [vmem:[%s7 + $0x48] sm:$0xff]
  %v1577 = vld [vmem:[%s7 + $0x50] sm:$0xff]
  %v1578 = vld [vmem:[%s7 + $0x58] sm:$0xff]
  %v1579 = vld [vmem:[%s7 + $0x60] sm:$0xff]
  %v1580 = vld [vmem:[%s7 + $0x68] sm:$0xff]
  %v1581 = vld [vmem:[%s7 + $0x70] sm:$0xff]
  %v1582 = vld [vmem:[%s7 + $0x78] sm:$0xff]
  %v1583 = vld [vmem:[%s8] sm:$0x1]
  %v1585 = vlaneseq
  %v1586 = vshrl.u32 %v1585, 7
  %v1587 = vsub.s32 0, %v1586
  %v1588 = vrot.slane %v1583, %v1587
  %1590 = vmatprep.subr.mxu0 0.0
  %1591 = vmatpush1.msra.mxu0 %v1567
  %1592 = vmatprep.subr.mxu0 0.0
  %1593 = vmatpush1.msra.mxu0 %v1568
  %1594 = vmatprep.subr.mxu0 0.0
  %1595 = vmatpush1.msra.mxu0 %v1569
  %1596 = vmatprep.subr.mxu0 0.0
  %1597 = vmatpush1.msra.mxu0 %v1570
  %1598 = vmatprep.subr.mxu0 0.0
  %1599 = vmatpush1.msra.mxu0 %v1571
  %1600 = vmatprep.subr.mxu0 0.0
  %1601 = vmatpush1.msra.mxu0 %v1572
  %1602 = vmatprep.subr.mxu0 0.0
  %1603 = vmatpush1.msra.mxu0 %v1573
  %1604 = vmatprep.subr.mxu0 0.0
  %1605 = vmatpush1.msra.mxu0 %v1574
  %1606 = vmatprep.subr.mxu0 0.0
  %1607 = vmatpush1.msra.mxu0 %v1575
  %1608 = vmatprep.subr.mxu0 0.0
  %1609 = vmatpush1.msra.mxu0 %v1576
  %1610 = vmatprep.subr.mxu0 0.0
  %1611 = vmatpush1.msra.mxu0 %v1577
  %1612 = vmatprep.subr.mxu0 0.0
  %1613 = vmatpush1.msra.mxu0 %v1578
  %1614 = vmatprep.subr.mxu0 0.0
  %1615 = vmatpush1.msra.mxu0 %v1579
  %1616 = vmatprep.subr.mxu0 0.0
  %1617 = vmatpush1.msra.mxu0 %v1580
  %1618 = vmatprep.subr.mxu0 0.0
  %1619 = vmatpush1.msra.mxu0 %v1581
  %1620 = vmatprep.subr.mxu0 0.0
  %1621 = vmatpush1.msra.mxu0 %v1582
  %1622 = vmatprep.subr.mxu0 0.0
  %1623 = vmatpush1.msra.mxu0 0.0
  %1624 = vmatprep.subr.mxu0 0.0
  %1625 = vmatpush1.msra.mxu0 0.0
  %1626 = vmatprep.subr.mxu0 0.0
  %1627 = vmatpush1.msra.mxu0 0.0
  %1628 = vmatprep.subr.mxu0 0.0
  %1629 = vmatpush1.msra.mxu0 0.0
  %1630 = vmatprep.subr.mxu0 0.0
  %1631 = vmatpush1.msra.mxu0 0.0
  %1632 = vmatprep.subr.mxu0 0.0
  %1633 = vmatpush1.msra.mxu0 0.0
  %1634 = vmatprep.subr.mxu0 0.0
  %1635 = vmatpush1.msra.mxu0 0.0
  %1636 = vmatprep.subr.mxu0 0.0
  %1637 = vmatpush1.msra.mxu0 0.0
  %1638 = vmatprep.subr.mxu0 0.0
  %1639 = vmatpush1.msra.mxu0 0.0
  %1640 = vmatprep.subr.mxu0 0.0
  %1641 = vmatpush1.msra.mxu0 0.0
  %1642 = vmatprep.subr.mxu0 0.0
  %1643 = vmatpush1.msra.mxu0 0.0
  %1644 = vmatprep.subr.mxu0 0.0
  %1645 = vmatpush1.msra.mxu0 0.0
  %1646 = vmatprep.subr.mxu0 0.0
  %1647 = vmatpush1.msra.mxu0 0.0
  %1648 = vmatprep.subr.mxu0 0.0
  %1649 = vmatpush1.msra.mxu0 0.0
  %1650 = vmatprep.subr.mxu0 0.0
  %1651 = vmatpush1.msra.mxu0 0.0
  %1652 = vmatprep.subr.mxu0 0.0
  %1653 = vmatpush1.msra.mxu0 0.0
  %1654 = vmatprep.mubr.f32.mxu0 0.0
  %1655 = vmatmul.mubr.f32.gmra.mrb[0].mxu0 %v71
  %v1656 = vpop.f32.mrb[0].mxu0
  %v1657 = vadd.f32 %v1588, %v1656
  %v1658 = vpop.f32.mrb[0].mxu0
  %1659 = vmatprep.mubr.f32.mxu0 0.0
  %1660 = vmatmul.mubr.f32.gmra.mrb[0].mxu0 %v72
  %v1661 = vpop.f32.mrb[0].mxu0
  %v1662 = vadd.f32 %v1588, %v1661
  %v1663 = vpop.f32.mrb[0].mxu0
  %1664 = vmatprep.mubr.f32.mxu0 0.0
  %1665 = vmatmul.mubr.f32.gmra.mrb[0].mxu0 %v73
  %v1666 = vpop.f32.mrb[0].mxu0
  %v1667 = vadd.f32 %v1588, %v1666
  %v1668 = vpop.f32.mrb[0].mxu0
  %1669 = vmatprep.mubr.f32.mxu0 0.0
  %1670 = vmatmul.mubr.f32.gmra.mrb[0].mxu0 %v74
  %v1671 = vpop.f32.mrb[0].mxu0
  %v1672 = vadd.f32 %v1588, %v1671
  %v1673 = vpop.f32.mrb[0].mxu0
  %1674 = vdwg.mxu0
  %v1675 = vadd.f32 %v1657, %v1563
  %v1676 = vadd.f32 %v1662, %v1564
  %v1677 = vadd.f32 %v1667, %v1565
  %v1678 = vadd.f32 %v1672, %v1566
  %v1679 = vmax.f32 %v1675, 0.0
  %v1680 = vmax.f32 %v1676, 0.0
  %v1681 = vmax.f32 %v1677, 0.0
  %v1682 = vmax.f32 %v1678, 0.0
  %1683 = vst [vmem:[%s13] sm:$0xff] %v1679
  %1684 = vst [vmem:[%s13 + $0x8] sm:$0xff] %v1680
  %1685 = vst [vmem:[%s13 + $0x10] sm:$0xff] %v1681
  %1686 = vst [vmem:[%s13 + $0x18] sm:$0xff] %v1682
  // Predicated region
  $region54: #{resblock_pallas.1} parent=0 // pred_check
    _
  $region55: #{resblock_pallas.1} parent=0 // pred_check_branch
    %1688 = sbr.rel (0) target = $region57
  $region56: #{resblock_pallas.1} parent=0 // pred_region
    _
  $region57: #{resblock_pallas.1} parent=0 // pred_fallthru
    _
  // Predicated region
  $region58: #{resblock_pallas.1} parent=0 // pred_check
    _
  $region59: #{resblock_pallas.1} parent=0 // pred_check_branch
    %1690 = sbr.rel (0) target = $region61
  $region60: #{resblock_pallas.1} parent=0 // pred_region
    _
  $region61: #{resblock_pallas.1} parent=0 // pred_fallthru
    _

</llo_original>
